<compile_context>
chip_gen: v6e
topology: v6e:2x2x1
jax: 0.10.0
libtpu: 0.0.40
codegen_flags: <defaults>
</compile_context>

<pallas_src>
import jax
import jax.numpy as jnp
from jax import lax
from jax.experimental import pallas as pl
from jax.experimental.pallas import tpu as pltpu

INPUT_DIM = 13
HIDDEN_DIM = 64
NUM_LAYERS = 2
OUTPUT_DIM = 1
D_PAD = 16          # zero-padded input feature dim (clean MXU K)


def _make_kernel(T, Bp):
    """Builds the kernel for a (time=T, padded-batch=Bp) problem."""
    H = HIDDEN_DIM

    def kernel(xf_ref, wih0_ref, whh0_ref, b0_ref,
               wih1_ref, whh1_ref, b1_ref,
               wout_ref, bout_ref, o_ref,
               zx_ref, hseq_ref):
        # xf_ref : (T*Bp, D_PAD) time-major, flattened (row = t*Bp + b)
        # wih*   : (K, 4H)  gate columns in (i, f, o, g) order
        # whh*   : (H, 4H)
        # b*     : (1, 4H)  = b_ih + b_hh, gate-permuted
        # wout   : (1, H),  bout: (1, 1)
        # zx_ref : (T*Bp, 4H) VMEM scratch (reused by both layers)
        # hseq_ref: (T*Bp, H) VMEM scratch (layer-0 hidden sequence)

        def cell(zx_t, h, c, whh_ref):
            # z = precomputed input projection (bias already folded in)
            #     + recurrent projection
            z = zx_t + jnp.dot(h, whh_ref[...],
                               preferred_element_type=jnp.float32)
            s = jax.nn.sigmoid(z[:, : 3 * H])     # one wide EUP call: i, f, o
            g = jnp.tanh(z[:, 3 * H:])            # candidate gate
            c_new = s[:, H:2 * H] * c + s[:, :H] * g       # f*c + i*g
            h_new = s[:, 2 * H:3 * H] * jnp.tanh(c_new)    # o*tanh(c)
            return h_new, c_new

        zeros = jnp.zeros((Bp, H), jnp.float32)

        # ---- Layer 0: hoisted input projection (one big matmul) ----
        zx_ref[...] = (jnp.dot(xf_ref[...], wih0_ref[...],
                               preferred_element_type=jnp.float32)
                       + b0_ref[...])
        h, c = zeros, zeros
        for t in range(T):                         # fully unrolled recurrence
            zt = zx_ref[pl.ds(t * Bp, Bp), :]
            h, c = cell(zt, h, c, whh0_ref)
            hseq_ref[pl.ds(t * Bp, Bp), :] = h

        # ---- Layer 1: hoisted input projection over the whole h0 sequence ----
        zx_ref[...] = (jnp.dot(hseq_ref[...], wih1_ref[...],
                               preferred_element_type=jnp.float32)
                       + b1_ref[...])
        h, c = zeros, zeros
        for t in range(T):                         # fully unrolled recurrence
            zt = zx_ref[pl.ds(t * Bp, Bp), :]
            h, c = cell(zt, h, c, whh1_ref)

        # ---- Head: Linear(H, 1) + sigmoid as a VPU reduction (no MXU) ----
        logits = jnp.sum(h * wout_ref[...], axis=-1, keepdims=True) + bout_ref[...]
        o_ref[...] = jax.nn.sigmoid(logits)

    return kernel


def init_torch_params(key):
    """Parameters in PyTorch's native layout/ordering (U(-k, k), k=1/sqrt(H))."""
    k = 1.0 / (HIDDEN_DIM ** 0.5)
    keys = jax.random.split(key, 10)

    def u(kk, shape):
        return jax.random.uniform(kk, shape, jnp.float32, minval=-k, maxval=k)

    H4 = 4 * HIDDEN_DIM
    w_ih_l0 = u(keys[0], (H4, INPUT_DIM))
    w_hh_l0 = u(keys[1], (H4, HIDDEN_DIM))
    b_ih_l0 = u(keys[2], (H4,))
    b_hh_l0 = u(keys[3], (H4,))
    w_ih_l1 = u(keys[4], (H4, HIDDEN_DIM))
    w_hh_l1 = u(keys[5], (H4, HIDDEN_DIM))
    b_ih_l1 = u(keys[6], (H4,))
    b_hh_l1 = u(keys[7], (H4,))
    w_out = u(keys[8], (OUTPUT_DIM, HIDDEN_DIM))
    b_out = u(keys[9], (OUTPUT_DIM,))
    return (w_ih_l0, w_hh_l0, b_ih_l0, b_hh_l0,
            w_ih_l1, w_hh_l1, b_ih_l1, b_hh_l1, w_out, b_out)


def pack_params(torch_params):
    """PyTorch layout -> kernel layout.

    - transpose (4H, in) -> (in, 4H)
    - permute gate columns (i, f, g, o) -> (i, f, o, g)  (wide activations)
    - fuse b_ih + b_hh into one (1, 4H) bias
    - zero-pad layer-0 input rows from D=13 to D_PAD=16
    """
    (w_ih_l0, w_hh_l0, b_ih_l0, b_hh_l0,
     w_ih_l1, w_hh_l1, b_ih_l1, b_hh_l1, w_out, b_out) = torch_params
    H = HIDDEN_DIM
    perm = jnp.concatenate([jnp.arange(0, H), jnp.arange(H, 2 * H),
                            jnp.arange(3 * H, 4 * H), jnp.arange(2 * H, 3 * H)])

    def to_kernel(w):                 # (4H, in) -> (in, 4H), permuted columns
        return jnp.transpose(w[perm], (1, 0)).astype(jnp.float32)

    def fuse_bias(bi, bh):            # (1, 4H), permuted, fused
        return (bi + bh)[perm][None, :].astype(jnp.float32)

    wih0 = jnp.pad(to_kernel(w_ih_l0), ((0, D_PAD - INPUT_DIM), (0, 0)))
    whh0 = to_kernel(w_hh_l0)
    b0 = fuse_bias(b_ih_l0, b_hh_l0)
    wih1 = to_kernel(w_ih_l1)
    whh1 = to_kernel(w_hh_l1)
    b1 = fuse_bias(b_ih_l1, b_hh_l1)
    wout = w_out.astype(jnp.float32)              # (1, H)
    bout = b_out[None, :].astype(jnp.float32)     # (1, 1)
    return (wih0, whh0, b0, wih1, whh1, b1, wout, bout)


def lstm_forward(x, packed_params):
    # x: (B, T, D) float32, batch_first like the PyTorch module
    B, T, D = x.shape
    assert D == INPUT_DIM
    Bp = ((B + 7) // 8) * 8                       # sublane-aligned batch

    # time-major, pad batch -> Bp and features -> D_PAD, flatten to (T*Bp, D_PAD)
    x_tm = jnp.transpose(x, (1, 0, 2)).astype(jnp.float32)
    x_tm = jnp.pad(x_tm, ((0, 0), (0, Bp - B), (0, D_PAD - D)))
    x_flat = x_tm.reshape(T * Bp, D_PAD)

    vmem = pl.BlockSpec(memory_space=pltpu.MemorySpace.VMEM)
    # TODO(synk): for large batches on v7x, add a grid over the batch axis with
    # dimension_semantics=("parallel",) to use both TensorCores.
    out = pl.pallas_call(
        _make_kernel(T, Bp),
        out_shape=jax.ShapeDtypeStruct((Bp, OUTPUT_DIM), jnp.float32),
        in_specs=[vmem] * (1 + len(packed_params)),
        out_specs=vmem,
        scratch_shapes=[
            pltpu.VMEM((T * Bp, 4 * HIDDEN_DIM), jnp.float32),  # zx scratch
            pltpu.VMEM((T * Bp, HIDDEN_DIM), jnp.float32),      # h0 sequence
        ],
    )(x_flat, *packed_params)
    return out[:B]


if __name__ == "__main__":
    B, T = 4, 8
    x = jax.random.normal(jax.random.PRNGKey(0), (B, T, INPUT_DIM),
                          dtype=jnp.float32)
    params = pack_params(init_torch_params(jax.random.PRNGKey(42)))

    out = lstm_forward(x, params)
    out = jax.block_until_ready(out)
    assert out.shape == (B, OUTPUT_DIM)
    assert bool(jnp.all(jnp.isfinite(out)))
    assert bool(jnp.all((out > 0.0) & (out < 1.0)))   # sigmoid range
    print("KERNEL_OK")
</pallas_src>

<mosaic_0001>
module attributes {stable_mosaic.version = 11 : i64} {
  func.func @kernel(%arg0: memref<64x16xf32, #tpu.memory_space<vmem>>, %arg1: memref<16x256xf32, #tpu.memory_space<vmem>>, %arg2: memref<64x256xf32, #tpu.memory_space<vmem>>, %arg3: memref<1x256xf32, #tpu.memory_space<vmem>>, %arg4: memref<64x256xf32, #tpu.memory_space<vmem>>, %arg5: memref<64x256xf32, #tpu.memory_space<vmem>>, %arg6: memref<1x256xf32, #tpu.memory_space<vmem>>, %arg7: memref<1x64xf32, #tpu.memory_space<vmem>>, %arg8: memref<1x1xf32, #tpu.memory_space<vmem>>, %arg9: memref<8x1xf32, #tpu.memory_space<vmem>>, %arg10: memref<64x256xf32, #tpu.memory_space<vmem>>, %arg11: memref<64x64xf32, #tpu.memory_space<vmem>>) attributes {dimension_semantics = [], scalar_prefetch = 0 : i64, scratch_operands = 2 : i64, tpu.core_type = #tpu.core_type<tc>} {
    %cst = arith.constant 0.000000e+00 : f32
    %0 = vector.broadcast %cst : f32 to vector<8x64xf32>
    %c0 = arith.constant 0 : index
    %c0_0 = arith.constant 0 : index
    %1 = vector.load %arg0[%c0, %c0_0] : memref<64x16xf32, #tpu.memory_space<vmem>>, vector<64x16xf32>
    %c0_1 = arith.constant 0 : index
    %c0_2 = arith.constant 0 : index
    %2 = vector.load %arg1[%c0_1, %c0_2] : memref<16x256xf32, #tpu.memory_space<vmem>>, vector<16x256xf32>
    %cst_3 = arith.constant dense<0.000000e+00> : vector<64x256xf32>
    %3 = tpu.matmul %1, %2, %cst_3 {dimension_numbers = #tpu.dot_dimension_numbers<[1], [0], [0], [1], [0, 0, 1, 1], [], []>} : vector<64x16xf32>, vector<16x256xf32>, vector<64x256xf32> -> vector<64x256xf32>
    %c0_4 = arith.constant 0 : index
    %c0_5 = arith.constant 0 : index
    %4 = vector.load %arg3[%c0_4, %c0_5] : memref<1x256xf32, #tpu.memory_space<vmem>>, vector<1x256xf32>
    %5 = vector.broadcast %4 : vector<1x256xf32> to vector<64x256xf32>
    %6 = arith.addf %3, %5 : vector<64x256xf32>
    %c0_6 = arith.constant 0 : index
    %c0_7 = arith.constant 0 : index
    %7 = vector.load %arg10[%c0_6, %c0_7] : memref<64x256xf32, #tpu.memory_space<vmem>>, vector<64x256xf32>
    tpu.vector_store %arg10[%c0_6, %c0_7], %6 {strides = array<i32>} : memref<64x256xf32, #tpu.memory_space<vmem>>, vector<64x256xf32>,
    %c0_8 = arith.constant 0 : index
    %c0_9 = arith.constant 0 : index
    %8 = vector.load %arg10[%c0_8, %c0_9] : memref<64x256xf32, #tpu.memory_space<vmem>>, vector<8x256xf32>
    %c0_10 = arith.constant 0 : index
    %c0_11 = arith.constant 0 : index
    %9 = vector.load %arg2[%c0_10, %c0_11] : memref<64x256xf32, #tpu.memory_space<vmem>>, vector<64x256xf32>
    %cst_12 = arith.constant dense<0.000000e+00> : vector<8x256xf32>
    %10 = tpu.matmul %0, %9, %cst_12 {dimension_numbers = #tpu.dot_dimension_numbers<[1], [0], [0], [1], [0, 0, 1, 1], [], []>} : vector<8x64xf32>, vector<64x256xf32>, vector<8x256xf32> -> vector<8x256xf32>
    %11 = arith.addf %8, %10 : vector<8x256xf32>
    %12 = vector.extract_strided_slice %11 {offsets = [0, 0], sizes = [8, 192], strides = [1, 1]} : vector<8x256xf32> to vector<8x192xf32>
    %13 = arith.negf %12 : vector<8x192xf32>
    %14 = math.exp %13 : vector<8x192xf32>
    %cst_13 = arith.constant 1.000000e+00 : f32
    %15 = vector.broadcast %cst_13 : f32 to vector<8x192xf32>
    %16 = arith.addf %15, %14 : vector<8x192xf32>
    %17 = arith.divf %15, %16 : vector<8x192xf32>
    %18 = vector.extract_strided_slice %11 {offsets = [0, 192], sizes = [8, 64], strides = [1, 1]} : vector<8x256xf32> to vector<8x64xf32>
    %19 = math.tanh %18 : vector<8x64xf32>
    %20 = vector.extract_strided_slice %17 {offsets = [0, 64], sizes = [8, 64], strides = [1, 1]} : vector<8x192xf32> to vector<8x64xf32>
    %21 = arith.mulf %20, %0 : vector<8x64xf32>
    %22 = vector.extract_strided_slice %17 {offsets = [0, 0], sizes = [8, 64], strides = [1, 1]} : vector<8x192xf32> to vector<8x64xf32>
    %23 = arith.mulf %22, %19 : vector<8x64xf32>
    %24 = arith.addf %21, %23 : vector<8x64xf32>
    %25 = vector.extract_strided_slice %17 {offsets = [0, 128], sizes = [8, 64], strides = [1, 1]} : vector<8x192xf32> to vector<8x64xf32>
    %26 = math.tanh %24 : vector<8x64xf32>
    %27 = arith.mulf %25, %26 : vector<8x64xf32>
    %c0_14 = arith.constant 0 : index
    %c0_15 = arith.constant 0 : index
    %28 = vector.load %arg11[%c0_14, %c0_15] : memref<64x64xf32, #tpu.memory_space<vmem>>, vector<8x64xf32>
    tpu.vector_store %arg11[%c0_14, %c0_15], %27 {strides = array<i32>} : memref<64x64xf32, #tpu.memory_space<vmem>>, vector<8x64xf32>,
    %c8 = arith.constant 8 : index
    %c0_16 = arith.constant 0 : index
    %29 = vector.load %arg10[%c8, %c0_16] : memref<64x256xf32, #tpu.memory_space<vmem>>, vector<8x256xf32>
    %c0_17 = arith.constant 0 : index
    %c0_18 = arith.constant 0 : index
    %30 = vector.load %arg2[%c0_17, %c0_18] : memref<64x256xf32, #tpu.memory_space<vmem>>, vector<64x256xf32>
    %cst_19 = arith.constant dense<0.000000e+00> : vector<8x256xf32>
    %31 = tpu.matmul %27, %30, %cst_19 {dimension_numbers = #tpu.dot_dimension_numbers<[1], [0], [0], [1], [0, 0, 1, 1], [], []>} : vector<8x64xf32>, vector<64x256xf32>, vector<8x256xf32> -> vector<8x256xf32>
    %32 = arith.addf %29, %31 : vector<8x256xf32>
    %33 = vector.extract_strided_slice %32 {offsets = [0, 0], sizes = [8, 192], strides = [1, 1]} : vector<8x256xf32> to vector<8x192xf32>
    %34 = arith.negf %33 : vector<8x192xf32>
    %35 = math.exp %34 : vector<8x192xf32>
    %cst_20 = arith.constant 1.000000e+00 : f32
    %36 = vector.broadcast %cst_20 : f32 to vector<8x192xf32>
    %37 = arith.addf %36, %35 : vector<8x192xf32>
    %38 = arith.divf %36, %37 : vector<8x192xf32>
    %39 = vector.extract_strided_slice %32 {offsets = [0, 192], sizes = [8, 64], strides = [1, 1]} : vector<8x256xf32> to vector<8x64xf32>
    %40 = math.tanh %39 : vector<8x64xf32>
    %41 = vector.extract_strided_slice %38 {offsets = [0, 64], sizes = [8, 64], strides = [1, 1]} : vector<8x192xf32> to vector<8x64xf32>
    %42 = arith.mulf %41, %24 : vector<8x64xf32>
    %43 = vector.extract_strided_slice %38 {offsets = [0, 0], sizes = [8, 64], strides = [1, 1]} : vector<8x192xf32> to vector<8x64xf32>
    %44 = arith.mulf %43, %40 : vector<8x64xf32>
    %45 = arith.addf %42, %44 : vector<8x64xf32>
    %46 = vector.extract_strided_slice %38 {offsets = [0, 128], sizes = [8, 64], strides = [1, 1]} : vector<8x192xf32> to vector<8x64xf32>
    %47 = math.tanh %45 : vector<8x64xf32>
    %48 = arith.mulf %46, %47 : vector<8x64xf32>
    %c8_21 = arith.constant 8 : index
    %c0_22 = arith.constant 0 : index
    %49 = vector.load %arg11[%c8_21, %c0_22] : memref<64x64xf32, #tpu.memory_space<vmem>>, vector<8x64xf32>
    tpu.vector_store %arg11[%c8_21, %c0_22], %48 {strides = array<i32>} : memref<64x64xf32, #tpu.memory_space<vmem>>, vector<8x64xf32>,
    %c16 = arith.constant 16 : index
    %c0_23 = arith.constant 0 : index
    %50 = vector.load %arg10[%c16, %c0_23] : memref<64x256xf32, #tpu.memory_space<vmem>>, vector<8x256xf32>
    %c0_24 = arith.constant 0 : index
    %c0_25 = arith.constant 0 : index
    %51 = vector.load %arg2[%c0_24, %c0_25] : memref<64x256xf32, #tpu.memory_space<vmem>>, vector<64x256xf32>
    %cst_26 = arith.constant dense<0.000000e+00> : vector<8x256xf32>
    %52 = tpu.matmul %48, %51, %cst_26 {dimension_numbers = #tpu.dot_dimension_numbers<[1], [0], [0], [1], [0, 0, 1, 1], [], []>} : vector<8x64xf32>, vector<64x256xf32>, vector<8x256xf32> -> vector<8x256xf32>
    %53 = arith.addf %50, %52 : vector<8x256xf32>
    %54 = vector.extract_strided_slice %53 {offsets = [0, 0], sizes = [8, 192], strides = [1, 1]} : vector<8x256xf32> to vector<8x192xf32>
    %55 = arith.negf %54 : vector<8x192xf32>
    %56 = math.exp %55 : vector<8x192xf32>
    %cst_27 = arith.constant 1.000000e+00 : f32
    %57 = vector.broadcast %cst_27 : f32 to vector<8x192xf32>
    %58 = arith.addf %57, %56 : vector<8x192xf32>
    %59 = arith.divf %57, %58 : vector<8x192xf32>
    %60 = vector.extract_strided_slice %53 {offsets = [0, 192], sizes = [8, 64], strides = [1, 1]} : vector<8x256xf32> to vector<8x64xf32>
    %61 = math.tanh %60 : vector<8x64xf32>
    %62 = vector.extract_strided_slice %59 {offsets = [0, 64], sizes = [8, 64], strides = [1, 1]} : vector<8x192xf32> to vector<8x64xf32>
    %63 = arith.mulf %62, %45 : vector<8x64xf32>
    %64 = vector.extract_strided_slice %59 {offsets = [0, 0], sizes = [8, 64], strides = [1, 1]} : vector<8x192xf32> to vector<8x64xf32>
    %65 = arith.mulf %64, %61 : vector<8x64xf32>
    %66 = arith.addf %63, %65 : vector<8x64xf32>
    %67 = vector.extract_strided_slice %59 {offsets = [0, 128], sizes = [8, 64], strides = [1, 1]} : vector<8x192xf32> to vector<8x64xf32>
    %68 = math.tanh %66 : vector<8x64xf32>
    %69 = arith.mulf %67, %68 : vector<8x64xf32>
    %c16_28 = arith.constant 16 : index
    %c0_29 = arith.constant 0 : index
    %70 = vector.load %arg11[%c16_28, %c0_29] : memref<64x64xf32, #tpu.memory_space<vmem>>, vector<8x64xf32>
    tpu.vector_store %arg11[%c16_28, %c0_29], %69 {strides = array<i32>} : memref<64x64xf32, #tpu.memory_space<vmem>>, vector<8x64xf32>,
    %c24 = arith.constant 24 : index
    %c0_30 = arith.constant 0 : index
    %71 = vector.load %arg10[%c24, %c0_30] : memref<64x256xf32, #tpu.memory_space<vmem>>, vector<8x256xf32>
    %c0_31 = arith.constant 0 : index
    %c0_32 = arith.constant 0 : index
    %72 = vector.load %arg2[%c0_31, %c0_32] : memref<64x256xf32, #tpu.memory_space<vmem>>, vector<64x256xf32>
    %cst_33 = arith.constant dense<0.000000e+00> : vector<8x256xf32>
    %73 = tpu.matmul %69, %72, %cst_33 {dimension_numbers = #tpu.dot_dimension_numbers<[1], [0], [0], [1], [0, 0, 1, 1], [], []>} : vector<8x64xf32>, vector<64x256xf32>, vector<8x256xf32> -> vector<8x256xf32>
    %74 = arith.addf %71, %73 : vector<8x256xf32>
    %75 = vector.extract_strided_slice %74 {offsets = [0, 0], sizes = [8, 192], strides = [1, 1]} : vector<8x256xf32> to vector<8x192xf32>
    %76 = arith.negf %75 : vector<8x192xf32>
    %77 = math.exp %76 : vector<8x192xf32>
    %cst_34 = arith.constant 1.000000e+00 : f32
    %78 = vector.broadcast %cst_34 : f32 to vector<8x192xf32>
    %79 = arith.addf %78, %77 : vector<8x192xf32>
    %80 = arith.divf %78, %79 : vector<8x192xf32>
    %81 = vector.extract_strided_slice %74 {offsets = [0, 192], sizes = [8, 64], strides = [1, 1]} : vector<8x256xf32> to vector<8x64xf32>
    %82 = math.tanh %81 : vector<8x64xf32>
    %83 = vector.extract_strided_slice %80 {offsets = [0, 64], sizes = [8, 64], strides = [1, 1]} : vector<8x192xf32> to vector<8x64xf32>
    %84 = arith.mulf %83, %66 : vector<8x64xf32>
    %85 = vector.extract_strided_slice %80 {offsets = [0, 0], sizes = [8, 64], strides = [1, 1]} : vector<8x192xf32> to vector<8x64xf32>
    %86 = arith.mulf %85, %82 : vector<8x64xf32>
    %87 = arith.addf %84, %86 : vector<8x64xf32>
    %88 = vector.extract_strided_slice %80 {offsets = [0, 128], sizes = [8, 64], strides = [1, 1]} : vector<8x192xf32> to vector<8x64xf32>
    %89 = math.tanh %87 : vector<8x64xf32>
    %90 = arith.mulf %88, %89 : vector<8x64xf32>
    %c24_35 = arith.constant 24 : index
    %c0_36 = arith.constant 0 : index
    %91 = vector.load %arg11[%c24_35, %c0_36] : memref<64x64xf32, #tpu.memory_space<vmem>>, vector<8x64xf32>
    tpu.vector_store %arg11[%c24_35, %c0_36], %90 {strides = array<i32>} : memref<64x64xf32, #tpu.memory_space<vmem>>, vector<8x64xf32>,
    %c32 = arith.constant 32 : index
    %c0_37 = arith.constant 0 : index
    %92 = vector.load %arg10[%c32, %c0_37] : memref<64x256xf32, #tpu.memory_space<vmem>>, vector<8x256xf32>
    %c0_38 = arith.constant 0 : index
    %c0_39 = arith.constant 0 : index
    %93 = vector.load %arg2[%c0_38, %c0_39] : memref<64x256xf32, #tpu.memory_space<vmem>>, vector<64x256xf32>
    %cst_40 = arith.constant dense<0.000000e+00> : vector<8x256xf32>
    %94 = tpu.matmul %90, %93, %cst_40 {dimension_numbers = #tpu.dot_dimension_numbers<[1], [0], [0], [1], [0, 0, 1, 1], [], []>} : vector<8x64xf32>, vector<64x256xf32>, vector<8x256xf32> -> vector<8x256xf32>
    %95 = arith.addf %92, %94 : vector<8x256xf32>
    %96 = vector.extract_strided_slice %95 {offsets = [0, 0], sizes = [8, 192], strides = [1, 1]} : vector<8x256xf32> to vector<8x192xf32>
    %97 = arith.negf %96 : vector<8x192xf32>
    %98 = math.exp %97 : vector<8x192xf32>
    %cst_41 = arith.constant 1.000000e+00 : f32
    %99 = vector.broadcast %cst_41 : f32 to vector<8x192xf32>
    %100 = arith.addf %99, %98 : vector<8x192xf32>
    %101 = arith.divf %99, %100 : vector<8x192xf32>
    %102 = vector.extract_strided_slice %95 {offsets = [0, 192], sizes = [8, 64], strides = [1, 1]} : vector<8x256xf32> to vector<8x64xf32>
    %103 = math.tanh %102 : vector<8x64xf32>
    %104 = vector.extract_strided_slice %101 {offsets = [0, 64], sizes = [8, 64], strides = [1, 1]} : vector<8x192xf32> to vector<8x64xf32>
    %105 = arith.mulf %104, %87 : vector<8x64xf32>
    %106 = vector.extract_strided_slice %101 {offsets = [0, 0], sizes = [8, 64], strides = [1, 1]} : vector<8x192xf32> to vector<8x64xf32>
    %107 = arith.mulf %106, %103 : vector<8x64xf32>
    %108 = arith.addf %105, %107 : vector<8x64xf32>
    %109 = vector.extract_strided_slice %101 {offsets = [0, 128], sizes = [8, 64], strides = [1, 1]} : vector<8x192xf32> to vector<8x64xf32>
    %110 = math.tanh %108 : vector<8x64xf32>
    %111 = arith.mulf %109, %110 : vector<8x64xf32>
    %c32_42 = arith.constant 32 : index
    %c0_43 = arith.constant 0 : index
    %112 = vector.load %arg11[%c32_42, %c0_43] : memref<64x64xf32, #tpu.memory_space<vmem>>, vector<8x64xf32>
    tpu.vector_store %arg11[%c32_42, %c0_43], %111 {strides = array<i32>} : memref<64x64xf32, #tpu.memory_space<vmem>>, vector<8x64xf32>,
    %c40 = arith.constant 40 : index
    %c0_44 = arith.constant 0 : index
    %113 = vector.load %arg10[%c40, %c0_44] : memref<64x256xf32, #tpu.memory_space<vmem>>, vector<8x256xf32>
    %c0_45 = arith.constant 0 : index
    %c0_46 = arith.constant 0 : index
    %114 = vector.load %arg2[%c0_45, %c0_46] : memref<64x256xf32, #tpu.memory_space<vmem>>, vector<64x256xf32>
    %cst_47 = arith.constant dense<0.000000e+00> : vector<8x256xf32>
    %115 = tpu.matmul %111, %114, %cst_47 {dimension_numbers = #tpu.dot_dimension_numbers<[1], [0], [0], [1], [0, 0, 1, 1], [], []>} : vector<8x64xf32>, vector<64x256xf32>, vector<8x256xf32> -> vector<8x256xf32>
    %116 = arith.addf %113, %115 : vector<8x256xf32>
    %117 = vector.extract_strided_slice %116 {offsets = [0, 0], sizes = [8, 192], strides = [1, 1]} : vector<8x256xf32> to vector<8x192xf32>
    %118 = arith.negf %117 : vector<8x192xf32>
    %119 = math.exp %118 : vector<8x192xf32>
    %cst_48 = arith.constant 1.000000e+00 : f32
    %120 = vector.broadcast %cst_48 : f32 to vector<8x192xf32>
    %121 = arith.addf %120, %119 : vector<8x192xf32>
    %122 = arith.divf %120, %121 : vector<8x192xf32>
    %123 = vector.extract_strided_slice %116 {offsets = [0, 192], sizes = [8, 64], strides = [1, 1]} : vector<8x256xf32> to vector<8x64xf32>
    %124 = math.tanh %123 : vector<8x64xf32>
    %125 = vector.extract_strided_slice %122 {offsets = [0, 64], sizes = [8, 64], strides = [1, 1]} : vector<8x192xf32> to vector<8x64xf32>
    %126 = arith.mulf %125, %108 : vector<8x64xf32>
    %127 = vector.extract_strided_slice %122 {offsets = [0, 0], sizes = [8, 64], strides = [1, 1]} : vector<8x192xf32> to vector<8x64xf32>
    %128 = arith.mulf %127, %124 : vector<8x64xf32>
    %129 = arith.addf %126, %128 : vector<8x64xf32>
    %130 = vector.extract_strided_slice %122 {offsets = [0, 128], sizes = [8, 64], strides = [1, 1]} : vector<8x192xf32> to vector<8x64xf32>
    %131 = math.tanh %129 : vector<8x64xf32>
    %132 = arith.mulf %130, %131 : vector<8x64xf32>
    %c40_49 = arith.constant 40 : index
    %c0_50 = arith.constant 0 : index
    %133 = vector.load %arg11[%c40_49, %c0_50] : memref<64x64xf32, #tpu.memory_space<vmem>>, vector<8x64xf32>
    tpu.vector_store %arg11[%c40_49, %c0_50], %132 {strides = array<i32>} : memref<64x64xf32, #tpu.memory_space<vmem>>, vector<8x64xf32>,
    %c48 = arith.constant 48 : index
    %c0_51 = arith.constant 0 : index
    %134 = vector.load %arg10[%c48, %c0_51] : memref<64x256xf32, #tpu.memory_space<vmem>>, vector<8x256xf32>
    %c0_52 = arith.constant 0 : index
    %c0_53 = arith.constant 0 : index
    %135 = vector.load %arg2[%c0_52, %c0_53] : memref<64x256xf32, #tpu.memory_space<vmem>>, vector<64x256xf32>
    %cst_54 = arith.constant dense<0.000000e+00> : vector<8x256xf32>
    %136 = tpu.matmul %132, %135, %cst_54 {dimension_numbers = #tpu.dot_dimension_numbers<[1], [0], [0], [1], [0, 0, 1, 1], [], []>} : vector<8x64xf32>, vector<64x256xf32>, vector<8x256xf32> -> vector<8x256xf32>
    %137 = arith.addf %134, %136 : vector<8x256xf32>
    %138 = vector.extract_strided_slice %137 {offsets = [0, 0], sizes = [8, 192], strides = [1, 1]} : vector<8x256xf32> to vector<8x192xf32>
    %139 = arith.negf %138 : vector<8x192xf32>
    %140 = math.exp %139 : vector<8x192xf32>
    %cst_55 = arith.constant 1.000000e+00 : f32
    %141 = vector.broadcast %cst_55 : f32 to vector<8x192xf32>
    %142 = arith.addf %141, %140 : vector<8x192xf32>
    %143 = arith.divf %141, %142 : vector<8x192xf32>
    %144 = vector.extract_strided_slice %137 {offsets = [0, 192], sizes = [8, 64], strides = [1, 1]} : vector<8x256xf32> to vector<8x64xf32>
    %145 = math.tanh %144 : vector<8x64xf32>
    %146 = vector.extract_strided_slice %143 {offsets = [0, 64], sizes = [8, 64], strides = [1, 1]} : vector<8x192xf32> to vector<8x64xf32>
    %147 = arith.mulf %146, %129 : vector<8x64xf32>
    %148 = vector.extract_strided_slice %143 {offsets = [0, 0], sizes = [8, 64], strides = [1, 1]} : vector<8x192xf32> to vector<8x64xf32>
    %149 = arith.mulf %148, %145 : vector<8x64xf32>
    %150 = arith.addf %147, %149 : vector<8x64xf32>
    %151 = vector.extract_strided_slice %143 {offsets = [0, 128], sizes = [8, 64], strides = [1, 1]} : vector<8x192xf32> to vector<8x64xf32>
    %152 = math.tanh %150 : vector<8x64xf32>
    %153 = arith.mulf %151, %152 : vector<8x64xf32>
    %c48_56 = arith.constant 48 : index
    %c0_57 = arith.constant 0 : index
    %154 = vector.load %arg11[%c48_56, %c0_57] : memref<64x64xf32, #tpu.memory_space<vmem>>, vector<8x64xf32>
    tpu.vector_store %arg11[%c48_56, %c0_57], %153 {strides = array<i32>} : memref<64x64xf32, #tpu.memory_space<vmem>>, vector<8x64xf32>,
    %c56 = arith.constant 56 : index
    %c0_58 = arith.constant 0 : index
    %155 = vector.load %arg10[%c56, %c0_58] : memref<64x256xf32, #tpu.memory_space<vmem>>, vector<8x256xf32>
    %c0_59 = arith.constant 0 : index
    %c0_60 = arith.constant 0 : index
    %156 = vector.load %arg2[%c0_59, %c0_60] : memref<64x256xf32, #tpu.memory_space<vmem>>, vector<64x256xf32>
    %cst_61 = arith.constant dense<0.000000e+00> : vector<8x256xf32>
    %157 = tpu.matmul %153, %156, %cst_61 {dimension_numbers = #tpu.dot_dimension_numbers<[1], [0], [0], [1], [0, 0, 1, 1], [], []>} : vector<8x64xf32>, vector<64x256xf32>, vector<8x256xf32> -> vector<8x256xf32>
    %158 = arith.addf %155, %157 : vector<8x256xf32>
    %159 = vector.extract_strided_slice %158 {offsets = [0, 0], sizes = [8, 192], strides = [1, 1]} : vector<8x256xf32> to vector<8x192xf32>
    %160 = arith.negf %159 : vector<8x192xf32>
    %161 = math.exp %160 : vector<8x192xf32>
    %cst_62 = arith.constant 1.000000e+00 : f32
    %162 = vector.broadcast %cst_62 : f32 to vector<8x192xf32>
    %163 = arith.addf %162, %161 : vector<8x192xf32>
    %164 = arith.divf %162, %163 : vector<8x192xf32>
    %165 = vector.extract_strided_slice %158 {offsets = [0, 192], sizes = [8, 64], strides = [1, 1]} : vector<8x256xf32> to vector<8x64xf32>
    %166 = math.tanh %165 : vector<8x64xf32>
    %167 = vector.extract_strided_slice %164 {offsets = [0, 64], sizes = [8, 64], strides = [1, 1]} : vector<8x192xf32> to vector<8x64xf32>
    %168 = arith.mulf %167, %150 : vector<8x64xf32>
    %169 = vector.extract_strided_slice %164 {offsets = [0, 0], sizes = [8, 64], strides = [1, 1]} : vector<8x192xf32> to vector<8x64xf32>
    %170 = arith.mulf %169, %166 : vector<8x64xf32>
    %171 = arith.addf %168, %170 : vector<8x64xf32>
    %172 = vector.extract_strided_slice %164 {offsets = [0, 128], sizes = [8, 64], strides = [1, 1]} : vector<8x192xf32> to vector<8x64xf32>
    %173 = math.tanh %171 : vector<8x64xf32>
    %174 = arith.mulf %172, %173 : vector<8x64xf32>
    %c56_63 = arith.constant 56 : index
    %c0_64 = arith.constant 0 : index
    %175 = vector.load %arg11[%c56_63, %c0_64] : memref<64x64xf32, #tpu.memory_space<vmem>>, vector<8x64xf32>
    tpu.vector_store %arg11[%c56_63, %c0_64], %174 {strides = array<i32>} : memref<64x64xf32, #tpu.memory_space<vmem>>, vector<8x64xf32>,
    %c0_65 = arith.constant 0 : index
    %c0_66 = arith.constant 0 : index
    %176 = vector.load %arg11[%c0_65, %c0_66] : memref<64x64xf32, #tpu.memory_space<vmem>>, vector<64x64xf32>
    %c0_67 = arith.constant 0 : index
    %c0_68 = arith.constant 0 : index
    %177 = vector.load %arg4[%c0_67, %c0_68] : memref<64x256xf32, #tpu.memory_space<vmem>>, vector<64x256xf32>
    %cst_69 = arith.constant dense<0.000000e+00> : vector<64x256xf32>
    %178 = tpu.matmul %176, %177, %cst_69 {dimension_numbers = #tpu.dot_dimension_numbers<[1], [0], [0], [1], [0, 0, 1, 1], [], []>} : vector<64x64xf32>, vector<64x256xf32>, vector<64x256xf32> -> vector<64x256xf32>
    %c0_70 = arith.constant 0 : index
    %c0_71 = arith.constant 0 : index
    %179 = vector.load %arg6[%c0_70, %c0_71] : memref<1x256xf32, #tpu.memory_space<vmem>>, vector<1x256xf32>
    %180 = vector.broadcast %179 : vector<1x256xf32> to vector<64x256xf32>
    %181 = arith.addf %178, %180 : vector<64x256xf32>
    %c0_72 = arith.constant 0 : index
    %c0_73 = arith.constant 0 : index
    %182 = vector.load %arg10[%c0_72, %c0_73] : memref<64x256xf32, #tpu.memory_space<vmem>>, vector<64x256xf32>
    tpu.vector_store %arg10[%c0_72, %c0_73], %181 {strides = array<i32>} : memref<64x256xf32, #tpu.memory_space<vmem>>, vector<64x256xf32>,
    %c0_74 = arith.constant 0 : index
    %c0_75 = arith.constant 0 : index
    %183 = vector.load %arg10[%c0_74, %c0_75] : memref<64x256xf32, #tpu.memory_space<vmem>>, vector<8x256xf32>
    %c0_76 = arith.constant 0 : index
    %c0_77 = arith.constant 0 : index
    %184 = vector.load %arg5[%c0_76, %c0_77] : memref<64x256xf32, #tpu.memory_space<vmem>>, vector<64x256xf32>
    %cst_78 = arith.constant dense<0.000000e+00> : vector<8x256xf32>
    %185 = tpu.matmul %0, %184, %cst_78 {dimension_numbers = #tpu.dot_dimension_numbers<[1], [0], [0], [1], [0, 0, 1, 1], [], []>} : vector<8x64xf32>, vector<64x256xf32>, vector<8x256xf32> -> vector<8x256xf32>
    %186 = arith.addf %183, %185 : vector<8x256xf32>
    %187 = vector.extract_strided_slice %186 {offsets = [0, 0], sizes = [8, 192], strides = [1, 1]} : vector<8x256xf32> to vector<8x192xf32>
    %188 = arith.negf %187 : vector<8x192xf32>
    %189 = math.exp %188 : vector<8x192xf32>
    %cst_79 = arith.constant 1.000000e+00 : f32
    %190 = vector.broadcast %cst_79 : f32 to vector<8x192xf32>
    %191 = arith.addf %190, %189 : vector<8x192xf32>
    %192 = arith.divf %190, %191 : vector<8x192xf32>
    %193 = vector.extract_strided_slice %186 {offsets = [0, 192], sizes = [8, 64], strides = [1, 1]} : vector<8x256xf32> to vector<8x64xf32>
    %194 = math.tanh %193 : vector<8x64xf32>
    %195 = vector.extract_strided_slice %192 {offsets = [0, 64], sizes = [8, 64], strides = [1, 1]} : vector<8x192xf32> to vector<8x64xf32>
    %196 = arith.mulf %195, %0 : vector<8x64xf32>
    %197 = vector.extract_strided_slice %192 {offsets = [0, 0], sizes = [8, 64], strides = [1, 1]} : vector<8x192xf32> to vector<8x64xf32>
    %198 = arith.mulf %197, %194 : vector<8x64xf32>
    %199 = arith.addf %196, %198 : vector<8x64xf32>
    %200 = vector.extract_strided_slice %192 {offsets = [0, 128], sizes = [8, 64], strides = [1, 1]} : vector<8x192xf32> to vector<8x64xf32>
    %201 = math.tanh %199 : vector<8x64xf32>
    %202 = arith.mulf %200, %201 : vector<8x64xf32>
    %c8_80 = arith.constant 8 : index
    %c0_81 = arith.constant 0 : index
    %203 = vector.load %arg10[%c8_80, %c0_81] : memref<64x256xf32, #tpu.memory_space<vmem>>, vector<8x256xf32>
    %c0_82 = arith.constant 0 : index
    %c0_83 = arith.constant 0 : index
    %204 = vector.load %arg5[%c0_82, %c0_83] : memref<64x256xf32, #tpu.memory_space<vmem>>, vector<64x256xf32>
    %cst_84 = arith.constant dense<0.000000e+00> : vector<8x256xf32>
    %205 = tpu.matmul %202, %204, %cst_84 {dimension_numbers = #tpu.dot_dimension_numbers<[1], [0], [0], [1], [0, 0, 1, 1], [], []>} : vector<8x64xf32>, vector<64x256xf32>, vector<8x256xf32> -> vector<8x256xf32>
    %206 = arith.addf %203, %205 : vector<8x256xf32>
    %207 = vector.extract_strided_slice %206 {offsets = [0, 0], sizes = [8, 192], strides = [1, 1]} : vector<8x256xf32> to vector<8x192xf32>
    %208 = arith.negf %207 : vector<8x192xf32>
    %209 = math.exp %208 : vector<8x192xf32>
    %cst_85 = arith.constant 1.000000e+00 : f32
    %210 = vector.broadcast %cst_85 : f32 to vector<8x192xf32>
    %211 = arith.addf %210, %209 : vector<8x192xf32>
    %212 = arith.divf %210, %211 : vector<8x192xf32>
    %213 = vector.extract_strided_slice %206 {offsets = [0, 192], sizes = [8, 64], strides = [1, 1]} : vector<8x256xf32> to vector<8x64xf32>
    %214 = math.tanh %213 : vector<8x64xf32>
    %215 = vector.extract_strided_slice %212 {offsets = [0, 64], sizes = [8, 64], strides = [1, 1]} : vector<8x192xf32> to vector<8x64xf32>
    %216 = arith.mulf %215, %199 : vector<8x64xf32>
    %217 = vector.extract_strided_slice %212 {offsets = [0, 0], sizes = [8, 64], strides = [1, 1]} : vector<8x192xf32> to vector<8x64xf32>
    %218 = arith.mulf %217, %214 : vector<8x64xf32>
    %219 = arith.addf %216, %218 : vector<8x64xf32>
    %220 = vector.extract_strided_slice %212 {offsets = [0, 128], sizes = [8, 64], strides = [1, 1]} : vector<8x192xf32> to vector<8x64xf32>
    %221 = math.tanh %219 : vector<8x64xf32>
    %222 = arith.mulf %220, %221 : vector<8x64xf32>
    %c16_86 = arith.constant 16 : index
    %c0_87 = arith.constant 0 : index
    %223 = vector.load %arg10[%c16_86, %c0_87] : memref<64x256xf32, #tpu.memory_space<vmem>>, vector<8x256xf32>
    %c0_88 = arith.constant 0 : index
    %c0_89 = arith.constant 0 : index
    %224 = vector.load %arg5[%c0_88, %c0_89] : memref<64x256xf32, #tpu.memory_space<vmem>>, vector<64x256xf32>
    %cst_90 = arith.constant dense<0.000000e+00> : vector<8x256xf32>
    %225 = tpu.matmul %222, %224, %cst_90 {dimension_numbers = #tpu.dot_dimension_numbers<[1], [0], [0], [1], [0, 0, 1, 1], [], []>} : vector<8x64xf32>, vector<64x256xf32>, vector<8x256xf32> -> vector<8x256xf32>
    %226 = arith.addf %223, %225 : vector<8x256xf32>
    %227 = vector.extract_strided_slice %226 {offsets = [0, 0], sizes = [8, 192], strides = [1, 1]} : vector<8x256xf32> to vector<8x192xf32>
    %228 = arith.negf %227 : vector<8x192xf32>
    %229 = math.exp %228 : vector<8x192xf32>
    %cst_91 = arith.constant 1.000000e+00 : f32
    %230 = vector.broadcast %cst_91 : f32 to vector<8x192xf32>
    %231 = arith.addf %230, %229 : vector<8x192xf32>
    %232 = arith.divf %230, %231 : vector<8x192xf32>
    %233 = vector.extract_strided_slice %226 {offsets = [0, 192], sizes = [8, 64], strides = [1, 1]} : vector<8x256xf32> to vector<8x64xf32>
    %234 = math.tanh %233 : vector<8x64xf32>
    %235 = vector.extract_strided_slice %232 {offsets = [0, 64], sizes = [8, 64], strides = [1, 1]} : vector<8x192xf32> to vector<8x64xf32>
    %236 = arith.mulf %235, %219 : vector<8x64xf32>
    %237 = vector.extract_strided_slice %232 {offsets = [0, 0], sizes = [8, 64], strides = [1, 1]} : vector<8x192xf32> to vector<8x64xf32>
    %238 = arith.mulf %237, %234 : vector<8x64xf32>
    %239 = arith.addf %236, %238 : vector<8x64xf32>
    %240 = vector.extract_strided_slice %232 {offsets = [0, 128], sizes = [8, 64], strides = [1, 1]} : vector<8x192xf32> to vector<8x64xf32>
    %241 = math.tanh %239 : vector<8x64xf32>
    %242 = arith.mulf %240, %241 : vector<8x64xf32>
    %c24_92 = arith.constant 24 : index
    %c0_93 = arith.constant 0 : index
    %243 = vector.load %arg10[%c24_92, %c0_93] : memref<64x256xf32, #tpu.memory_space<vmem>>, vector<8x256xf32>
    %c0_94 = arith.constant 0 : index
    %c0_95 = arith.constant 0 : index
    %244 = vector.load %arg5[%c0_94, %c0_95] : memref<64x256xf32, #tpu.memory_space<vmem>>, vector<64x256xf32>
    %cst_96 = arith.constant dense<0.000000e+00> : vector<8x256xf32>
    %245 = tpu.matmul %242, %244, %cst_96 {dimension_numbers = #tpu.dot_dimension_numbers<[1], [0], [0], [1], [0, 0, 1, 1], [], []>} : vector<8x64xf32>, vector<64x256xf32>, vector<8x256xf32> -> vector<8x256xf32>
    %246 = arith.addf %243, %245 : vector<8x256xf32>
    %247 = vector.extract_strided_slice %246 {offsets = [0, 0], sizes = [8, 192], strides = [1, 1]} : vector<8x256xf32> to vector<8x192xf32>
    %248 = arith.negf %247 : vector<8x192xf32>
    %249 = math.exp %248 : vector<8x192xf32>
    %cst_97 = arith.constant 1.000000e+00 : f32
    %250 = vector.broadcast %cst_97 : f32 to vector<8x192xf32>
    %251 = arith.addf %250, %249 : vector<8x192xf32>
    %252 = arith.divf %250, %251 : vector<8x192xf32>
    %253 = vector.extract_strided_slice %246 {offsets = [0, 192], sizes = [8, 64], strides = [1, 1]} : vector<8x256xf32> to vector<8x64xf32>
    %254 = math.tanh %253 : vector<8x64xf32>
    %255 = vector.extract_strided_slice %252 {offsets = [0, 64], sizes = [8, 64], strides = [1, 1]} : vector<8x192xf32> to vector<8x64xf32>
    %256 = arith.mulf %255, %239 : vector<8x64xf32>
    %257 = vector.extract_strided_slice %252 {offsets = [0, 0], sizes = [8, 64], strides = [1, 1]} : vector<8x192xf32> to vector<8x64xf32>
    %258 = arith.mulf %257, %254 : vector<8x64xf32>
    %259 = arith.addf %256, %258 : vector<8x64xf32>
    %260 = vector.extract_strided_slice %252 {offsets = [0, 128], sizes = [8, 64], strides = [1, 1]} : vector<8x192xf32> to vector<8x64xf32>
    %261 = math.tanh %259 : vector<8x64xf32>
    %262 = arith.mulf %260, %261 : vector<8x64xf32>
    %c32_98 = arith.constant 32 : index
    %c0_99 = arith.constant 0 : index
    %263 = vector.load %arg10[%c32_98, %c0_99] : memref<64x256xf32, #tpu.memory_space<vmem>>, vector<8x256xf32>
    %c0_100 = arith.constant 0 : index
    %c0_101 = arith.constant 0 : index
    %264 = vector.load %arg5[%c0_100, %c0_101] : memref<64x256xf32, #tpu.memory_space<vmem>>, vector<64x256xf32>
    %cst_102 = arith.constant dense<0.000000e+00> : vector<8x256xf32>
    %265 = tpu.matmul %262, %264, %cst_102 {dimension_numbers = #tpu.dot_dimension_numbers<[1], [0], [0], [1], [0, 0, 1, 1], [], []>} : vector<8x64xf32>, vector<64x256xf32>, vector<8x256xf32> -> vector<8x256xf32>
    %266 = arith.addf %263, %265 : vector<8x256xf32>
    %267 = vector.extract_strided_slice %266 {offsets = [0, 0], sizes = [8, 192], strides = [1, 1]} : vector<8x256xf32> to vector<8x192xf32>
    %268 = arith.negf %267 : vector<8x192xf32>
    %269 = math.exp %268 : vector<8x192xf32>
    %cst_103 = arith.constant 1.000000e+00 : f32
    %270 = vector.broadcast %cst_103 : f32 to vector<8x192xf32>
    %271 = arith.addf %270, %269 : vector<8x192xf32>
    %272 = arith.divf %270, %271 : vector<8x192xf32>
    %273 = vector.extract_strided_slice %266 {offsets = [0, 192], sizes = [8, 64], strides = [1, 1]} : vector<8x256xf32> to vector<8x64xf32>
    %274 = math.tanh %273 : vector<8x64xf32>
    %275 = vector.extract_strided_slice %272 {offsets = [0, 64], sizes = [8, 64], strides = [1, 1]} : vector<8x192xf32> to vector<8x64xf32>
    %276 = arith.mulf %275, %259 : vector<8x64xf32>
    %277 = vector.extract_strided_slice %272 {offsets = [0, 0], sizes = [8, 64], strides = [1, 1]} : vector<8x192xf32> to vector<8x64xf32>
    %278 = arith.mulf %277, %274 : vector<8x64xf32>
    %279 = arith.addf %276, %278 : vector<8x64xf32>
    %280 = vector.extract_strided_slice %272 {offsets = [0, 128], sizes = [8, 64], strides = [1, 1]} : vector<8x192xf32> to vector<8x64xf32>
    %281 = math.tanh %279 : vector<8x64xf32>
    %282 = arith.mulf %280, %281 : vector<8x64xf32>
    %c40_104 = arith.constant 40 : index
    %c0_105 = arith.constant 0 : index
    %283 = vector.load %arg10[%c40_104, %c0_105] : memref<64x256xf32, #tpu.memory_space<vmem>>, vector<8x256xf32>
    %c0_106 = arith.constant 0 : index
    %c0_107 = arith.constant 0 : index
    %284 = vector.load %arg5[%c0_106, %c0_107] : memref<64x256xf32, #tpu.memory_space<vmem>>, vector<64x256xf32>
    %cst_108 = arith.constant dense<0.000000e+00> : vector<8x256xf32>
    %285 = tpu.matmul %282, %284, %cst_108 {dimension_numbers = #tpu.dot_dimension_numbers<[1], [0], [0], [1], [0, 0, 1, 1], [], []>} : vector<8x64xf32>, vector<64x256xf32>, vector<8x256xf32> -> vector<8x256xf32>
    %286 = arith.addf %283, %285 : vector<8x256xf32>
    %287 = vector.extract_strided_slice %286 {offsets = [0, 0], sizes = [8, 192], strides = [1, 1]} : vector<8x256xf32> to vector<8x192xf32>
    %288 = arith.negf %287 : vector<8x192xf32>
    %289 = math.exp %288 : vector<8x192xf32>
    %cst_109 = arith.constant 1.000000e+00 : f32
    %290 = vector.broadcast %cst_109 : f32 to vector<8x192xf32>
    %291 = arith.addf %290, %289 : vector<8x192xf32>
    %292 = arith.divf %290, %291 : vector<8x192xf32>
    %293 = vector.extract_strided_slice %286 {offsets = [0, 192], sizes = [8, 64], strides = [1, 1]} : vector<8x256xf32> to vector<8x64xf32>
    %294 = math.tanh %293 : vector<8x64xf32>
    %295 = vector.extract_strided_slice %292 {offsets = [0, 64], sizes = [8, 64], strides = [1, 1]} : vector<8x192xf32> to vector<8x64xf32>
    %296 = arith.mulf %295, %279 : vector<8x64xf32>
    %297 = vector.extract_strided_slice %292 {offsets = [0, 0], sizes = [8, 64], strides = [1, 1]} : vector<8x192xf32> to vector<8x64xf32>
    %298 = arith.mulf %297, %294 : vector<8x64xf32>
    %299 = arith.addf %296, %298 : vector<8x64xf32>
    %300 = vector.extract_strided_slice %292 {offsets = [0, 128], sizes = [8, 64], strides = [1, 1]} : vector<8x192xf32> to vector<8x64xf32>
    %301 = math.tanh %299 : vector<8x64xf32>
    %302 = arith.mulf %300, %301 : vector<8x64xf32>
    %c48_110 = arith.constant 48 : index
    %c0_111 = arith.constant 0 : index
    %303 = vector.load %arg10[%c48_110, %c0_111] : memref<64x256xf32, #tpu.memory_space<vmem>>, vector<8x256xf32>
    %c0_112 = arith.constant 0 : index
    %c0_113 = arith.constant 0 : index
    %304 = vector.load %arg5[%c0_112, %c0_113] : memref<64x256xf32, #tpu.memory_space<vmem>>, vector<64x256xf32>
    %cst_114 = arith.constant dense<0.000000e+00> : vector<8x256xf32>
    %305 = tpu.matmul %302, %304, %cst_114 {dimension_numbers = #tpu.dot_dimension_numbers<[1], [0], [0], [1], [0, 0, 1, 1], [], []>} : vector<8x64xf32>, vector<64x256xf32>, vector<8x256xf32> -> vector<8x256xf32>
    %306 = arith.addf %303, %305 : vector<8x256xf32>
    %307 = vector.extract_strided_slice %306 {offsets = [0, 0], sizes = [8, 192], strides = [1, 1]} : vector<8x256xf32> to vector<8x192xf32>
    %308 = arith.negf %307 : vector<8x192xf32>
    %309 = math.exp %308 : vector<8x192xf32>
    %cst_115 = arith.constant 1.000000e+00 : f32
    %310 = vector.broadcast %cst_115 : f32 to vector<8x192xf32>
    %311 = arith.addf %310, %309 : vector<8x192xf32>
    %312 = arith.divf %310, %311 : vector<8x192xf32>
    %313 = vector.extract_strided_slice %306 {offsets = [0, 192], sizes = [8, 64], strides = [1, 1]} : vector<8x256xf32> to vector<8x64xf32>
    %314 = math.tanh %313 : vector<8x64xf32>
    %315 = vector.extract_strided_slice %312 {offsets = [0, 64], sizes = [8, 64], strides = [1, 1]} : vector<8x192xf32> to vector<8x64xf32>
    %316 = arith.mulf %315, %299 : vector<8x64xf32>
    %317 = vector.extract_strided_slice %312 {offsets = [0, 0], sizes = [8, 64], strides = [1, 1]} : vector<8x192xf32> to vector<8x64xf32>
    %318 = arith.mulf %317, %314 : vector<8x64xf32>
    %319 = arith.addf %316, %318 : vector<8x64xf32>
    %320 = vector.extract_strided_slice %312 {offsets = [0, 128], sizes = [8, 64], strides = [1, 1]} : vector<8x192xf32> to vector<8x64xf32>
    %321 = math.tanh %319 : vector<8x64xf32>
    %322 = arith.mulf %320, %321 : vector<8x64xf32>
    %c56_116 = arith.constant 56 : index
    %c0_117 = arith.constant 0 : index
    %323 = vector.load %arg10[%c56_116, %c0_117] : memref<64x256xf32, #tpu.memory_space<vmem>>, vector<8x256xf32>
    %c0_118 = arith.constant 0 : index
    %c0_119 = arith.constant 0 : index
    %324 = vector.load %arg5[%c0_118, %c0_119] : memref<64x256xf32, #tpu.memory_space<vmem>>, vector<64x256xf32>
    %cst_120 = arith.constant dense<0.000000e+00> : vector<8x256xf32>
    %325 = tpu.matmul %322, %324, %cst_120 {dimension_numbers = #tpu.dot_dimension_numbers<[1], [0], [0], [1], [0, 0, 1, 1], [], []>} : vector<8x64xf32>, vector<64x256xf32>, vector<8x256xf32> -> vector<8x256xf32>
    %326 = arith.addf %323, %325 : vector<8x256xf32>
    %327 = vector.extract_strided_slice %326 {offsets = [0, 0], sizes = [8, 192], strides = [1, 1]} : vector<8x256xf32> to vector<8x192xf32>
    %328 = arith.negf %327 : vector<8x192xf32>
    %329 = math.exp %328 : vector<8x192xf32>
    %cst_121 = arith.constant 1.000000e+00 : f32
    %330 = vector.broadcast %cst_121 : f32 to vector<8x192xf32>
    %331 = arith.addf %330, %329 : vector<8x192xf32>
    %332 = arith.divf %330, %331 : vector<8x192xf32>
    %333 = vector.extract_strided_slice %326 {offsets = [0, 192], sizes = [8, 64], strides = [1, 1]} : vector<8x256xf32> to vector<8x64xf32>
    %334 = math.tanh %333 : vector<8x64xf32>
    %335 = vector.extract_strided_slice %332 {offsets = [0, 64], sizes = [8, 64], strides = [1, 1]} : vector<8x192xf32> to vector<8x64xf32>
    %336 = arith.mulf %335, %319 : vector<8x64xf32>
    %337 = vector.extract_strided_slice %332 {offsets = [0, 0], sizes = [8, 64], strides = [1, 1]} : vector<8x192xf32> to vector<8x64xf32>
    %338 = arith.mulf %337, %334 : vector<8x64xf32>
    %339 = arith.addf %336, %338 : vector<8x64xf32>
    %340 = vector.extract_strided_slice %332 {offsets = [0, 128], sizes = [8, 64], strides = [1, 1]} : vector<8x192xf32> to vector<8x64xf32>
    %341 = math.tanh %339 : vector<8x64xf32>
    %342 = arith.mulf %340, %341 : vector<8x64xf32>
    %c0_122 = arith.constant 0 : index
    %c0_123 = arith.constant 0 : index
    %343 = vector.load %arg7[%c0_122, %c0_123] : memref<1x64xf32, #tpu.memory_space<vmem>>, vector<1x64xf32>
    %344 = vector.broadcast %343 : vector<1x64xf32> to vector<8x64xf32>
    %345 = arith.mulf %342, %344 : vector<8x64xf32>
    %cst_124 = arith.constant dense<0.000000e+00> : vector<8xf32>
    %346 = vector.multi_reduction <add>, %345, %cst_124 [1] : vector<8x64xf32> to vector<8xf32>
    %347 = vector.shape_cast %346 : vector<8xf32> to vector<8x1xf32>
    %c0_125 = arith.constant 0 : index
    %c0_126 = arith.constant 0 : index
    %348 = vector.load %arg8[%c0_125, %c0_126] : memref<1x1xf32, #tpu.memory_space<vmem>>, vector<1x1xf32>
    %349 = vector.broadcast %348 : vector<1x1xf32> to vector<8x1xf32>
    %350 = arith.addf %347, %349 : vector<8x1xf32>
    %351 = arith.negf %350 : vector<8x1xf32>
    %352 = math.exp %351 : vector<8x1xf32>
    %cst_127 = arith.constant 1.000000e+00 : f32
    %353 = vector.broadcast %cst_127 : f32 to vector<8x1xf32>
    %354 = arith.addf %353, %352 : vector<8x1xf32>
    %355 = arith.divf %353, %354 : vector<8x1xf32>
    %c0_128 = arith.constant 0 : index
    %c0_129 = arith.constant 0 : index
    %356 = vector.load %arg9[%c0_128, %c0_129] : memref<8x1xf32, #tpu.memory_space<vmem>>, vector<8x1xf32>
    tpu.vector_store %arg9[%c0_128, %c0_129], %355 {strides = array<i32>} : memref<8x1xf32, #tpu.memory_space<vmem>>, vector<8x1xf32>,
    return
  }
}

</mosaic_0001>

<llo_original>
// kernel: tpu_custom_call.1
$region0: #{tpu_custom_call.1}
  #allocation0 [shape = 'u32[]', space=smem, size = 0x4, offset = 0x4, fixed_abs, tag = 'smem constant byte address 0x4 - core index']
  #allocation1 [shape = 'u32[144,128]{1,0:T(1,128)}', space=vmem, size = 0x12000, scoped, tag = 'internal scratch']
  #allocation2 [shape = 'f32[64,256]{1,0:T(8,128)}', space=vmem, size = 0x10000, scoped, tag = 'scratch operand']
  #allocation3 [shape = 'f32[64,64]{1,0:T(8,128)}', space=vmem, size = 0x8000, scoped, tag = 'scratch operand']
  #allocation4 [shape = 'f32[1,1]{1,0:T(1,128)S(1)}', space=vmem, size = 0x200, scoped, tag = 'scoped memory for tpu_custom_call.1']
  %s0 = inlined_call_operand.vmem [shape: f32[64,16], index: 0, kind: input, shape index: {}]
  %s1 = inlined_call_operand.vmem [shape: f32[16,256], index: 1, kind: input, shape index: {}]
  %s2 = inlined_call_operand.hbm [shape: f32[64,256], index: 2, kind: input, shape index: {}]
  %s3 = inlined_call_operand.vmem [shape: f32[1,256], index: 3, kind: input, shape index: {}]
  %s4 = inlined_call_operand.hbm [shape: f32[64,256], index: 4, kind: input, shape index: {}]
  %s5 = inlined_call_operand.hbm [shape: f32[64,256], index: 5, kind: input, shape index: {}]
  %s6 = inlined_call_operand.vmem [shape: f32[1,256], index: 6, kind: input, shape index: {}]
  %s7 = inlined_call_operand.vmem [shape: f32[1,64], index: 7, kind: input, shape index: {}]
  %s8 = inlined_call_operand.<no memory space> [shape: f32[1,1], index: 8, kind: input, shape index: {}]
  %s9 = inlined_call_operand.vmem [shape: f32[8,1], index: 9, kind: output, shape index: {}]
  %s10 = sld [smem:[#allocation0]]
  $region58: #{tpu_custom_call.1} parent=0
    _
  %s12 = ssub.s32 1, %s10
  %s13 = scalar_select 0, %s12, %s10
  %v14 = vstv %s8
  %15 = vst [vmem:[#allocation4] sm:$0x1] %v14
  $region1: #{tpu_custom_call.1} parent=0
    #allocation5 [shape = 'u8[65536]{0}', space=vmem, size = 0x10000, scoped, tag = 'input window, operand 2, single buffered']
    #allocation6 [shape = 's32[1]{0}', space=sflag, size = 0x4, scoped, tag = 'scoped memory for tpu_custom_call.1']
    #allocation7 [shape = 'u8[65536]{0}', space=vmem, size = 0x10000, scoped, tag = 'input window, operand 4, single buffered']
    #allocation8 [shape = 's32[1]{0}', space=sflag, size = 0x4, scoped, tag = 'scoped memory for tpu_custom_call.1']
    #allocation9 [shape = 'u8[65536]{0}', space=vmem, size = 0x10000, scoped, tag = 'input window, operand 5, single buffered']
    %16 = vsyncpa [#allocation6], 0
    %17 = vsyncpa [#allocation8], 0
    // Predicated region
    $region2: #{tpu_custom_call.1} parent=1 // pred_check
      _
    $region3: #{tpu_custom_call.1} parent=1 // pred_check_branch
      %19 = sbr.rel (0) target = $region5
    $region4: #{tpu_custom_call.1} parent=1 // pred_region
      _
    $region5: #{tpu_custom_call.1} parent=1 // pred_fallthru
      _
    // Predicated region
    $region6: #{tpu_custom_call.1} parent=1 // pred_check
      _
    $region7: #{tpu_custom_call.1} parent=1 // pred_check_branch
      %21 = sbr.rel (0) target = $region9
    $region8: #{tpu_custom_call.1} parent=1 // pred_region
      _
    $region9: #{tpu_custom_call.1} parent=1 // pred_fallthru
      _
    // Predicated region
    $region10: #{tpu_custom_call.1} parent=1 // pred_check
      _
    $region11: #{tpu_custom_call.1} parent=1 // pred_check_branch
      %23 = sbr.rel (0) target = $region13
    $region12: #{tpu_custom_call.1} parent=1 // pred_region
      %s25 = ssub.s32 2048, 2048
      %26 = vsyncadd [#allocation6], %s25
      %s27 = sshll.u32 [#allocation5], 4
      %s28 = int_to_ptr.vmem [resolvable:$true] %s27
      %33 = dma.hbm_to_vmem [thread:$0]  %s2, 2048, %s28, [#allocation6], 256, 256, 16
    $region13: #{tpu_custom_call.1} parent=1 // pred_fallthru
      _
    // Predicated region
    $region14: #{tpu_custom_call.1} parent=1 // pred_check
      _
    $region15: #{tpu_custom_call.1} parent=1 // pred_check_branch
      %35 = sbr.rel (0) target = $region17
    $region16: #{tpu_custom_call.1} parent=1 // pred_region
      _
    $region17: #{tpu_custom_call.1} parent=1 // pred_fallthru
      _
    // Predicated region
    $region18: #{tpu_custom_call.1} parent=1 // pred_check
      _
    $region19: #{tpu_custom_call.1} parent=1 // pred_check_branch
      %37 = sbr.rel (0) target = $region21
    $region20: #{tpu_custom_call.1} parent=1 // pred_region
      %s39 = ssub.s32 2048, 2048
      %40 = vsyncadd [#allocation8], %s39
      %s41 = sshll.u32 [#allocation7], 4
      %s42 = int_to_ptr.vmem [resolvable:$true] %s41
      %47 = dma.hbm_to_vmem [thread:$0]  %s4, 2048, %s42, [#allocation8], 256, 256, 16
    $region21: #{tpu_custom_call.1} parent=1 // pred_fallthru
      _
    // Predicated region
    $region22: #{tpu_custom_call.1} parent=1 // pred_check
      _
    $region23: #{tpu_custom_call.1} parent=1 // pred_check_branch
      %49 = sbr.rel (0) target = $region25
    $region24: #{tpu_custom_call.1} parent=1 // pred_region
      %s51 = ssub.s32 2048, 2048
      %52 = vsyncadd [#allocation8], %s51
      %s53 = sshll.u32 [#allocation9], 4
      %s54 = int_to_ptr.vmem [resolvable:$true] %s53
      %59 = dma.hbm_to_vmem [thread:$0]  %s5, 2048, %s54, [#allocation8], 256, 256, 16
    $region25: #{tpu_custom_call.1} parent=1 // pred_fallthru
      _
    // Predicated region
    $region26: #{tpu_custom_call.1} parent=1 // pred_check
      _
    $region27: #{tpu_custom_call.1} parent=1 // pred_check_branch
      %61 = sbr.rel (0) target = $region29
    $region28: #{tpu_custom_call.1} parent=1 // pred_region
      _
    $region29: #{tpu_custom_call.1} parent=1 // pred_fallthru
      _
    // Predicated region
    $region30: #{tpu_custom_call.1} parent=1 // pred_check
      _
    $region31: #{tpu_custom_call.1} parent=1 // pred_check_branch
      %63 = sbr.rel (0) target = $region33
    $region32: #{tpu_custom_call.1} parent=1 // pred_region
      _
    $region33: #{tpu_custom_call.1} parent=1 // pred_fallthru
      _
    // Predicated region
    $region34: #{tpu_custom_call.1} parent=1 // pred_check
      _
    $region35: #{tpu_custom_call.1} parent=1 // pred_check_branch
      %65 = sbr.rel (0) target = $region37
    $region36: #{tpu_custom_call.1} parent=1 // pred_region
      _
    $region37: #{tpu_custom_call.1} parent=1 // pred_fallthru
      _
    // Predicated region
    $region38: #{tpu_custom_call.1} parent=1 // pred_check
      _
    $region39: #{tpu_custom_call.1} parent=1 // pred_check_branch
      %67 = sbr.rel (0) target = $region41
    $region40: #{tpu_custom_call.1} parent=1 // pred_region
      %68 = dma.done [#allocation6], 2048
    $region41: #{tpu_custom_call.1} parent=1 // pred_fallthru
      _
    // Predicated region
    $region42: #{tpu_custom_call.1} parent=1 // pred_check
      _
    $region43: #{tpu_custom_call.1} parent=1 // pred_check_branch
      %70 = sbr.rel (0) target = $region45
    $region44: #{tpu_custom_call.1} parent=1 // pred_region
      %71 = dma.done [#allocation8], 2048
    $region45: #{tpu_custom_call.1} parent=1 // pred_fallthru
      _
    // Predicated region
    $region46: #{tpu_custom_call.1} parent=1 // pred_check
      _
    $region47: #{tpu_custom_call.1} parent=1 // pred_check_branch
      %73 = sbr.rel (0) target = $region49
    $region48: #{tpu_custom_call.1} parent=1 // pred_region
      %74 = dma.done [#allocation8], 2048
    $region49: #{tpu_custom_call.1} parent=1 // pred_fallthru
      _
    %v75 = vld [vmem:[%s0] sm:$0xff]
    %v76 = vld [vmem:[%s0 + $0x8] sm:$0xff]
    %v77 = vld [vmem:[%s0 + $0x10] sm:$0xff]
    %v78 = vld [vmem:[%s0 + $0x18] sm:$0xff]
    %v79 = vld [vmem:[%s0 + $0x20] sm:$0xff]
    %v80 = vld [vmem:[%s0 + $0x28] sm:$0xff]
    %v81 = vld [vmem:[%s0 + $0x30] sm:$0xff]
    %v82 = vld [vmem:[%s0 + $0x38] sm:$0xff]
    %v83 = vld [vmem:[%s1] sm:$0xff]
    %v84 = vld [vmem:[%s1 + $0x8] sm:$0xff]
    %v85 = vld [vmem:[%s1 + $0x10] sm:$0xff]
    %v86 = vld [vmem:[%s1 + $0x18] sm:$0xff]
    %v87 = vld [vmem:[%s3] sm:$0x3]
    %v89 = vlaneseq
    %v90 = vshrl.u32 %v89, 7
    %v91 = vsub.s32 0, %v90
    %v92 = vrot.slane %v87, %v91
    %v93 = vlaneseq
    %v94 = vshrl.u32 %v93, 7
    %v95 = vsub.s32 1, %v94
    %v96 = vrot.slane %v87, %v95
    %vm99 = vcmask 130048
    %v101 = vsel %vm99, %v75, 0
    %v104 = vsel %vm99, %v76, 0
    %v107 = vsel %vm99, %v77, 0
    %v110 = vsel %vm99, %v78, 0
    %v113 = vsel %vm99, %v79, 0
    %v116 = vsel %vm99, %v80, 0
    %v119 = vsel %vm99, %v81, 0
    %v122 = vsel %vm99, %v82, 0
    %124 = vmatprep.subr.mxu0 0.0
    %125 = vmatpush1.msra.mxu0 0.0
    %126 = vmatprep.subr.mxu0 0.0
    %127 = vmatpush1.msra.mxu0 0.0
    %128 = vmatprep.subr.mxu0 0.0
    %129 = vmatpush1.msra.mxu0 0.0
    %130 = vmatprep.subr.mxu0 0.0
    %131 = vmatpush1.msra.mxu0 0.0
    %132 = vmatprep.subr.mxu0 0.0
    %133 = vmatpush1.msra.mxu0 0.0
    %134 = vmatprep.subr.mxu0 0.0
    %135 = vmatpush1.msra.mxu0 0.0
    %136 = vmatprep.subr.mxu0 0.0
    %137 = vmatpush1.msra.mxu0 0.0
    %138 = vmatprep.subr.mxu0 0.0
    %139 = vmatpush1.msra.mxu0 0.0
    %140 = vmatprep.subr.mxu0 0.0
    %141 = vmatpush1.msra.mxu0 0.0
    %142 = vmatprep.subr.mxu0 0.0
    %143 = vmatpush1.msra.mxu0 0.0
    %144 = vmatprep.subr.mxu0 0.0
    %145 = vmatpush1.msra.mxu0 0.0
    %146 = vmatprep.subr.mxu0 0.0
    %147 = vmatpush1.msra.mxu0 0.0
    %148 = vmatprep.subr.mxu0 0.0
    %149 = vmatpush1.msra.mxu0 0.0
    %150 = vmatprep.subr.mxu0 0.0
    %151 = vmatpush1.msra.mxu0 0.0
    %152 = vmatprep.subr.mxu0 %v86
    %153 = vmatpush1.msra.mxu0 %v85
    %154 = vmatprep.subr.mxu0 %v84
    %155 = vmatpush1.msra.mxu0 %v83
    %156 = vmatprep.subr.mxu0 0.0
    %157 = vmatpush2.msra.mxu0 0.0
    %158 = vmatprep.subr.mxu0 0.0
    %159 = vmatpush2.msra.mxu0 0.0
    %160 = vmatprep.subr.mxu0 0.0
    %161 = vmatpush2.msra.mxu0 0.0
    %162 = vmatprep.subr.mxu0 0.0
    %163 = vmatpush2.msra.mxu0 0.0
    %164 = vmatprep.subr.mxu0 0.0
    %165 = vmatpush2.msra.mxu0 0.0
    %166 = vmatprep.subr.mxu0 0.0
    %167 = vmatpush2.msra.mxu0 0.0
    %168 = vmatprep.subr.mxu0 0.0
    %169 = vmatpush2.msra.mxu0 0.0
    %170 = vmatprep.subr.mxu0 0.0
    %171 = vmatpush2.msra.mxu0 0.0
    %172 = vmatprep.subr.mxu0 0.0
    %173 = vmatpush2.msra.mxu0 0.0
    %174 = vmatprep.subr.mxu0 0.0
    %175 = vmatpush2.msra.mxu0 0.0
    %176 = vmatprep.subr.mxu0 0.0
    %177 = vmatpush2.msra.mxu0 0.0
    %178 = vmatprep.subr.mxu0 0.0
    %179 = vmatpush2.msra.mxu0 0.0
    %180 = vmatprep.subr.mxu0 0.0
    %181 = vmatpush2.msra.mxu0 0.0
    %182 = vmatprep.subr.mxu0 0.0
    %183 = vmatpush2.msra.mxu0 0.0
    %184 = vmatprep.subr.mxu0 0.0
    %185 = vmatpush2.msra.mxu0 0.0
    %186 = vmatprep.subr.mxu0 0.0
    %187 = vmatpush2.msra.mxu0 0.0
    %188 = vmatprep.mubr.f32.mxu0 0.0
    %189 = vmatmul.mubr.f32.gmra.mxu0 %v101
    %v190 = vpop.f32.mrf.mxu0
    %v191 = vadd.f32 %v92, %v190
    %v192 = vpop.f32.mrf.mxu0
    %v193 = vadd.f32 %v96, %v192
    %194 = vmatprep.mubr.f32.mxu0 0.0
    %195 = vmatmul.mubr.f32.gmra.mxu0 %v104
    %v196 = vpop.f32.mrf.mxu0
    %v197 = vadd.f32 %v92, %v196
    %v198 = vpop.f32.mrf.mxu0
    %v199 = vadd.f32 %v96, %v198
    %200 = vmatprep.mubr.f32.mxu0 0.0
    %201 = vmatmul.mubr.f32.gmra.mxu0 %v107
    %v202 = vpop.f32.mrf.mxu0
    %v203 = vadd.f32 %v92, %v202
    %v204 = vpop.f32.mrf.mxu0
    %v205 = vadd.f32 %v96, %v204
    %206 = vmatprep.mubr.f32.mxu0 0.0
    %207 = vmatmul.mubr.f32.gmra.mxu0 %v110
    %v208 = vpop.f32.mrf.mxu0
    %v209 = vadd.f32 %v92, %v208
    %v210 = vpop.f32.mrf.mxu0
    %v211 = vadd.f32 %v96, %v210
    %212 = vmatprep.mubr.f32.mxu0 0.0
    %213 = vmatmul.mubr.f32.gmra.mxu0 %v113
    %v214 = vpop.f32.mrf.mxu0
    %v215 = vadd.f32 %v92, %v214
    %v216 = vpop.f32.mrf.mxu0
    %v217 = vadd.f32 %v96, %v216
    %218 = vmatprep.mubr.f32.mxu0 0.0
    %219 = vmatmul.mubr.f32.gmra.mxu0 %v116
    %v220 = vpop.f32.mrf.mxu0
    %v221 = vadd.f32 %v92, %v220
    %v222 = vpop.f32.mrf.mxu0
    %v223 = vadd.f32 %v96, %v222
    %224 = vmatprep.mubr.f32.mxu0 0.0
    %225 = vmatmul.mubr.f32.gmra.mxu0 %v119
    %v226 = vpop.f32.mrf.mxu0
    %v227 = vadd.f32 %v92, %v226
    %v228 = vpop.f32.mrf.mxu0
    %v229 = vadd.f32 %v96, %v228
    %230 = vmatprep.mubr.f32.mxu0 0.0
    %231 = vmatmul.mubr.f32.gmra.mxu0 %v122
    %v232 = vpop.f32.mrf.mxu0
    %v233 = vadd.f32 %v92, %v232
    %v234 = vpop.f32.mrf.mxu0
    %v235 = vadd.f32 %v96, %v234
    %236 = vdwg.mxu0
    %237 = vst [vmem:[#allocation2] sm:$0xff] %v191
    %238 = vst [vmem:[#allocation2 + $0x8] sm:$0xff] %v193
    %239 = vst [vmem:[#allocation2 + $0x10] sm:$0xff] %v197
    %240 = vst [vmem:[#allocation2 + $0x18] sm:$0xff] %v199
    %241 = vst [vmem:[#allocation2 + $0x20] sm:$0xff] %v203
    %242 = vst [vmem:[#allocation2 + $0x28] sm:$0xff] %v205
    %243 = vst [vmem:[#allocation2 + $0x30] sm:$0xff] %v209
    %244 = vst [vmem:[#allocation2 + $0x38] sm:$0xff] %v211
    %245 = vst [vmem:[#allocation2 + $0x40] sm:$0xff] %v215
    %246 = vst [vmem:[#allocation2 + $0x48] sm:$0xff] %v217
    %247 = vst [vmem:[#allocation2 + $0x50] sm:$0xff] %v221
    %248 = vst [vmem:[#allocation2 + $0x58] sm:$0xff] %v223
    %249 = vst [vmem:[#allocation2 + $0x60] sm:$0xff] %v227
    %250 = vst [vmem:[#allocation2 + $0x68] sm:$0xff] %v229
    %251 = vst [vmem:[#allocation2 + $0x70] sm:$0xff] %v233
    %252 = vst [vmem:[#allocation2 + $0x78] sm:$0xff] %v235
    %v253 = vld [vmem:[#allocation2] sm:$0xff]
    %v254 = vld [vmem:[#allocation2 + $0x8] sm:$0xff]
    %v255 = vld [vmem:[#allocation5] sm:$0xff]
    %v256 = vld [vmem:[#allocation5 + $0x8] sm:$0xff]
    %v257 = vld [vmem:[#allocation5 + $0x10] sm:$0xff]
    %v258 = vld [vmem:[#allocation5 + $0x18] sm:$0xff]
    %v259 = vld [vmem:[#allocation5 + $0x20] sm:$0xff]
    %v260 = vld [vmem:[#allocation5 + $0x28] sm:$0xff]
    %v261 = vld [vmem:[#allocation5 + $0x30] sm:$0xff]
    %v262 = vld [vmem:[#allocation5 + $0x38] sm:$0xff]
    %v263 = vld [vmem:[#allocation5 + $0x40] sm:$0xff]
    %v264 = vld [vmem:[#allocation5 + $0x48] sm:$0xff]
    %v265 = vld [vmem:[#allocation5 + $0x50] sm:$0xff]
    %v266 = vld [vmem:[#allocation5 + $0x58] sm:$0xff]
    %v267 = vld [vmem:[#allocation5 + $0x60] sm:$0xff]
    %v268 = vld [vmem:[#allocation5 + $0x68] sm:$0xff]
    %v269 = vld [vmem:[#allocation5 + $0x70] sm:$0xff]
    %v270 = vld [vmem:[#allocation5 + $0x78] sm:$0xff]
    %vm271 = vcmask 523264
    %v273 = vsel %vm271, 0.0, 0
    %275 = vmatprep.subr.mxu0 0.0
    %276 = vmatpush1.msra.mxu0 0.0
    %277 = vmatprep.subr.mxu0 0.0
    %278 = vmatpush1.msra.mxu0 0.0
    %279 = vmatprep.subr.mxu0 0.0
    %280 = vmatpush1.msra.mxu0 0.0
    %281 = vmatprep.subr.mxu0 0.0
    %282 = vmatpush1.msra.mxu0 0.0
    %283 = vmatprep.subr.mxu0 0.0
    %284 = vmatpush1.msra.mxu0 0.0
    %285 = vmatprep.subr.mxu0 0.0
    %286 = vmatpush1.msra.mxu0 0.0
    %287 = vmatprep.subr.mxu0 0.0
    %288 = vmatpush1.msra.mxu0 0.0
    %289 = vmatprep.subr.mxu0 0.0
    %290 = vmatpush1.msra.mxu0 0.0
    %291 = vmatprep.subr.mxu0 %v270
    %292 = vmatpush1.msra.mxu0 %v269
    %293 = vmatprep.subr.mxu0 %v268
    %294 = vmatpush1.msra.mxu0 %v267
    %295 = vmatprep.subr.mxu0 %v266
    %296 = vmatpush1.msra.mxu0 %v265
    %297 = vmatprep.subr.mxu0 %v264
    %298 = vmatpush1.msra.mxu0 %v263
    %299 = vmatprep.subr.mxu0 %v262
    %300 = vmatpush1.msra.mxu0 %v261
    %301 = vmatprep.subr.mxu0 %v260
    %302 = vmatpush1.msra.mxu0 %v259
    %303 = vmatprep.subr.mxu0 %v258
    %304 = vmatpush1.msra.mxu0 %v257
    %305 = vmatprep.subr.mxu0 %v256
    %306 = vmatpush1.msra.mxu0 %v255
    %307 = vmatprep.subr.mxu0 0.0
    %308 = vmatpush2.msra.mxu0 0.0
    %309 = vmatprep.subr.mxu0 0.0
    %310 = vmatpush2.msra.mxu0 0.0
    %311 = vmatprep.subr.mxu0 0.0
    %312 = vmatpush2.msra.mxu0 0.0
    %313 = vmatprep.subr.mxu0 0.0
    %314 = vmatpush2.msra.mxu0 0.0
    %315 = vmatprep.subr.mxu0 0.0
    %316 = vmatpush2.msra.mxu0 0.0
    %317 = vmatprep.subr.mxu0 0.0
    %318 = vmatpush2.msra.mxu0 0.0
    %319 = vmatprep.subr.mxu0 0.0
    %320 = vmatpush2.msra.mxu0 0.0
    %321 = vmatprep.subr.mxu0 0.0
    %322 = vmatpush2.msra.mxu0 0.0
    %323 = vmatprep.subr.mxu0 0.0
    %324 = vmatpush2.msra.mxu0 0.0
    %325 = vmatprep.subr.mxu0 0.0
    %326 = vmatpush2.msra.mxu0 0.0
    %327 = vmatprep.subr.mxu0 0.0
    %328 = vmatpush2.msra.mxu0 0.0
    %329 = vmatprep.subr.mxu0 0.0
    %330 = vmatpush2.msra.mxu0 0.0
    %331 = vmatprep.subr.mxu0 0.0
    %332 = vmatpush2.msra.mxu0 0.0
    %333 = vmatprep.subr.mxu0 0.0
    %334 = vmatpush2.msra.mxu0 0.0
    %335 = vmatprep.subr.mxu0 0.0
    %336 = vmatpush2.msra.mxu0 0.0
    %337 = vmatprep.subr.mxu0 0.0
    %338 = vmatpush2.msra.mxu0 0.0
    %339 = vmatprep.mubr.f32.mxu0 0.0
    %340 = vmatmul.mubr.f32.gmra.mxu0 %v273
    %v341 = vpop.f32.mrf.mxu0
    %v342 = vadd.f32 0.0, %v341
    %v343 = vpop.f32.mrf.mxu0
    %v344 = vadd.f32 0.0, %v343
    %345 = vdwg.mxu0
    %v346 = vadd.f32 %v253, %v342
    %v347 = vadd.f32 %v254, %v344
    %v348 = vxor.u32 %v346, 2147483648
    %v349 = vxor.u32 %v347, 2147483648
    %v350 = vmul.f32 %v348, 1.442695
    %v351 = vpow.pop %v350
    %v352 = vmul.f32 %v349, 1.442695
    %v353 = vpow.pop %v352
    %v354 = vadd.f32 %v351, 1.0
    %v355 = vadd.f32 %v353, 1.0
    %v356 = vrcp.pop %v354
    %v357 = vmul.f32 1.0, %v356
    %v358 = vrcp.pop %v355
    %v359 = vmul.f32 1.0, %v358
    %v360 = vtanh.pop %v347
    %v361 = vmul.f32 %v357, 0.0
    %363 = vrot.lane.b32.xlu0 %v360, 64
    %v364 = vpop.permute.xlu0 %363
    %v366 = vmul.f32 %v357, %v364
    %368 = vrot.lane.b32.xlu0 %v366, 64
    %v369 = vpop.permute.xlu0 %368
    %v371 = vadd.f32 %v361, %v369
    %v372 = vtanh.pop %v371
    %374 = vrot.lane.b32.xlu0 %v372, 64
    %v375 = vpop.permute.xlu0 %374
    %v377 = vmul.f32 %v359, %v375
    %378 = vst.msk [vmem:[#allocation3] sm:$0xff] %vm271, %v377
    %v379 = vld [vmem:[#allocation2 + $0x10] sm:$0xff]
    %v380 = vld [vmem:[#allocation2 + $0x18] sm:$0xff]
    %v381 = vld [vmem:[#allocation5] sm:$0xff]
    %v382 = vld [vmem:[#allocation5 + $0x8] sm:$0xff]
    %v383 = vld [vmem:[#allocation5 + $0x10] sm:$0xff]
    %v384 = vld [vmem:[#allocation5 + $0x18] sm:$0xff]
    %v385 = vld [vmem:[#allocation5 + $0x20] sm:$0xff]
    %v386 = vld [vmem:[#allocation5 + $0x28] sm:$0xff]
    %v387 = vld [vmem:[#allocation5 + $0x30] sm:$0xff]
    %v388 = vld [vmem:[#allocation5 + $0x38] sm:$0xff]
    %v389 = vld [vmem:[#allocation5 + $0x40] sm:$0xff]
    %v390 = vld [vmem:[#allocation5 + $0x48] sm:$0xff]
    %v391 = vld [vmem:[#allocation5 + $0x50] sm:$0xff]
    %v392 = vld [vmem:[#allocation5 + $0x58] sm:$0xff]
    %v393 = vld [vmem:[#allocation5 + $0x60] sm:$0xff]
    %v394 = vld [vmem:[#allocation5 + $0x68] sm:$0xff]
    %v395 = vld [vmem:[#allocation5 + $0x70] sm:$0xff]
    %v396 = vld [vmem:[#allocation5 + $0x78] sm:$0xff]
    %v398 = vsel %vm271, %v377, 0
    %400 = vmatprep.subr.mxu0 0.0
    %401 = vmatpush1.msra.mxu0 0.0
    %402 = vmatprep.subr.mxu0 0.0
    %403 = vmatpush1.msra.mxu0 0.0
    %404 = vmatprep.subr.mxu0 0.0
    %405 = vmatpush1.msra.mxu0 0.0
    %406 = vmatprep.subr.mxu0 0.0
    %407 = vmatpush1.msra.mxu0 0.0
    %408 = vmatprep.subr.mxu0 0.0
    %409 = vmatpush1.msra.mxu0 0.0
    %410 = vmatprep.subr.mxu0 0.0
    %411 = vmatpush1.msra.mxu0 0.0
    %412 = vmatprep.subr.mxu0 0.0
    %413 = vmatpush1.msra.mxu0 0.0
    %414 = vmatprep.subr.mxu0 0.0
    %415 = vmatpush1.msra.mxu0 0.0
    %416 = vmatprep.subr.mxu0 %v396
    %417 = vmatpush1.msra.mxu0 %v395
    %418 = vmatprep.subr.mxu0 %v394
    %419 = vmatpush1.msra.mxu0 %v393
    %420 = vmatprep.subr.mxu0 %v392
    %421 = vmatpush1.msra.mxu0 %v391
    %422 = vmatprep.subr.mxu0 %v390
    %423 = vmatpush1.msra.mxu0 %v389
    %424 = vmatprep.subr.mxu0 %v388
    %425 = vmatpush1.msra.mxu0 %v387
    %426 = vmatprep.subr.mxu0 %v386
    %427 = vmatpush1.msra.mxu0 %v385
    %428 = vmatprep.subr.mxu0 %v384
    %429 = vmatpush1.msra.mxu0 %v383
    %430 = vmatprep.subr.mxu0 %v382
    %431 = vmatpush1.msra.mxu0 %v381
    %432 = vmatprep.subr.mxu0 0.0
    %433 = vmatpush2.msra.mxu0 0.0
    %434 = vmatprep.subr.mxu0 0.0
    %435 = vmatpush2.msra.mxu0 0.0
    %436 = vmatprep.subr.mxu0 0.0
    %437 = vmatpush2.msra.mxu0 0.0
    %438 = vmatprep.subr.mxu0 0.0
    %439 = vmatpush2.msra.mxu0 0.0
    %440 = vmatprep.subr.mxu0 0.0
    %441 = vmatpush2.msra.mxu0 0.0
    %442 = vmatprep.subr.mxu0 0.0
    %443 = vmatpush2.msra.mxu0 0.0
    %444 = vmatprep.subr.mxu0 0.0
    %445 = vmatpush2.msra.mxu0 0.0
    %446 = vmatprep.subr.mxu0 0.0
    %447 = vmatpush2.msra.mxu0 0.0
    %448 = vmatprep.subr.mxu0 0.0
    %449 = vmatpush2.msra.mxu0 0.0
    %450 = vmatprep.subr.mxu0 0.0
    %451 = vmatpush2.msra.mxu0 0.0
    %452 = vmatprep.subr.mxu0 0.0
    %453 = vmatpush2.msra.mxu0 0.0
    %454 = vmatprep.subr.mxu0 0.0
    %455 = vmatpush2.msra.mxu0 0.0
    %456 = vmatprep.subr.mxu0 0.0
    %457 = vmatpush2.msra.mxu0 0.0
    %458 = vmatprep.subr.mxu0 0.0
    %459 = vmatpush2.msra.mxu0 0.0
    %460 = vmatprep.subr.mxu0 0.0
    %461 = vmatpush2.msra.mxu0 0.0
    %462 = vmatprep.subr.mxu0 0.0
    %463 = vmatpush2.msra.mxu0 0.0
    %464 = vmatprep.mubr.f32.mxu0 0.0
    %465 = vmatmul.mubr.f32.gmra.mxu0 %v398
    %v466 = vpop.f32.mrf.mxu0
    %v467 = vadd.f32 0.0, %v466
    %v468 = vpop.f32.mrf.mxu0
    %v469 = vadd.f32 0.0, %v468
    %470 = vdwg.mxu0
    %v471 = vadd.f32 %v379, %v467
    %v472 = vadd.f32 %v380, %v469
    %v473 = vxor.u32 %v471, 2147483648
    %v474 = vxor.u32 %v472, 2147483648
    %v475 = vmul.f32 %v473, 1.442695
    %v476 = vpow.pop %v475
    %v477 = vmul.f32 %v474, 1.442695
    %v478 = vpow.pop %v477
    %v479 = vadd.f32 %v476, 1.0
    %v480 = vadd.f32 %v478, 1.0
    %v481 = vrcp.pop %v479
    %v482 = vmul.f32 1.0, %v481
    %v483 = vrcp.pop %v480
    %v484 = vmul.f32 1.0, %v483
    %v485 = vtanh.pop %v472
    %v486 = vmul.f32 %v482, %v371
    %488 = vrot.lane.b32.xlu0 %v485, 64
    %v489 = vpop.permute.xlu0 %488
    %v491 = vmul.f32 %v482, %v489
    %493 = vrot.lane.b32.xlu0 %v491, 64
    %v494 = vpop.permute.xlu0 %493
    %v496 = vadd.f32 %v486, %v494
    %v497 = vtanh.pop %v496
    %499 = vrot.lane.b32.xlu0 %v497, 64
    %v500 = vpop.permute.xlu0 %499
    %v502 = vmul.f32 %v484, %v500
    %503 = vst.msk [vmem:[#allocation3 + $0x8] sm:$0xff] %vm271, %v502
    %v504 = vld [vmem:[#allocation2 + $0x20] sm:$0xff]
    %v505 = vld [vmem:[#allocation2 + $0x28] sm:$0xff]
    %v506 = vld [vmem:[#allocation5] sm:$0xff]
    %v507 = vld [vmem:[#allocation5 + $0x8] sm:$0xff]
    %v508 = vld [vmem:[#allocation5 + $0x10] sm:$0xff]
    %v509 = vld [vmem:[#allocation5 + $0x18] sm:$0xff]
    %v510 = vld [vmem:[#allocation5 + $0x20] sm:$0xff]
    %v511 = vld [vmem:[#allocation5 + $0x28] sm:$0xff]
    %v512 = vld [vmem:[#allocation5 + $0x30] sm:$0xff]
    %v513 = vld [vmem:[#allocation5 + $0x38] sm:$0xff]
    %v514 = vld [vmem:[#allocation5 + $0x40] sm:$0xff]
    %v515 = vld [vmem:[#allocation5 + $0x48] sm:$0xff]
    %v516 = vld [vmem:[#allocation5 + $0x50] sm:$0xff]
    %v517 = vld [vmem:[#allocation5 + $0x58] sm:$0xff]
    %v518 = vld [vmem:[#allocation5 + $0x60] sm:$0xff]
    %v519 = vld [vmem:[#allocation5 + $0x68] sm:$0xff]
    %v520 = vld [vmem:[#allocation5 + $0x70] sm:$0xff]
    %v521 = vld [vmem:[#allocation5 + $0x78] sm:$0xff]
    %v523 = vsel %vm271, %v502, 0
    %525 = vmatprep.subr.mxu0 0.0
    %526 = vmatpush1.msra.mxu0 0.0
    %527 = vmatprep.subr.mxu0 0.0
    %528 = vmatpush1.msra.mxu0 0.0
    %529 = vmatprep.subr.mxu0 0.0
    %530 = vmatpush1.msra.mxu0 0.0
    %531 = vmatprep.subr.mxu0 0.0
    %532 = vmatpush1.msra.mxu0 0.0
    %533 = vmatprep.subr.mxu0 0.0
    %534 = vmatpush1.msra.mxu0 0.0
    %535 = vmatprep.subr.mxu0 0.0
    %536 = vmatpush1.msra.mxu0 0.0
    %537 = vmatprep.subr.mxu0 0.0
    %538 = vmatpush1.msra.mxu0 0.0
    %539 = vmatprep.subr.mxu0 0.0
    %540 = vmatpush1.msra.mxu0 0.0
    %541 = vmatprep.subr.mxu0 %v521
    %542 = vmatpush1.msra.mxu0 %v520
    %543 = vmatprep.subr.mxu0 %v519
    %544 = vmatpush1.msra.mxu0 %v518
    %545 = vmatprep.subr.mxu0 %v517
    %546 = vmatpush1.msra.mxu0 %v516
    %547 = vmatprep.subr.mxu0 %v515
    %548 = vmatpush1.msra.mxu0 %v514
    %549 = vmatprep.subr.mxu0 %v513
    %550 = vmatpush1.msra.mxu0 %v512
    %551 = vmatprep.subr.mxu0 %v511
    %552 = vmatpush1.msra.mxu0 %v510
    %553 = vmatprep.subr.mxu0 %v509
    %554 = vmatpush1.msra.mxu0 %v508
    %555 = vmatprep.subr.mxu0 %v507
    %556 = vmatpush1.msra.mxu0 %v506
    %557 = vmatprep.subr.mxu0 0.0
    %558 = vmatpush2.msra.mxu0 0.0
    %559 = vmatprep.subr.mxu0 0.0
    %560 = vmatpush2.msra.mxu0 0.0
    %561 = vmatprep.subr.mxu0 0.0
    %562 = vmatpush2.msra.mxu0 0.0
    %563 = vmatprep.subr.mxu0 0.0
    %564 = vmatpush2.msra.mxu0 0.0
    %565 = vmatprep.subr.mxu0 0.0
    %566 = vmatpush2.msra.mxu0 0.0
    %567 = vmatprep.subr.mxu0 0.0
    %568 = vmatpush2.msra.mxu0 0.0
    %569 = vmatprep.subr.mxu0 0.0
    %570 = vmatpush2.msra.mxu0 0.0
    %571 = vmatprep.subr.mxu0 0.0
    %572 = vmatpush2.msra.mxu0 0.0
    %573 = vmatprep.subr.mxu0 0.0
    %574 = vmatpush2.msra.mxu0 0.0
    %575 = vmatprep.subr.mxu0 0.0
    %576 = vmatpush2.msra.mxu0 0.0
    %577 = vmatprep.subr.mxu0 0.0
    %578 = vmatpush2.msra.mxu0 0.0
    %579 = vmatprep.subr.mxu0 0.0
    %580 = vmatpush2.msra.mxu0 0.0
    %581 = vmatprep.subr.mxu0 0.0
    %582 = vmatpush2.msra.mxu0 0.0
    %583 = vmatprep.subr.mxu0 0.0
    %584 = vmatpush2.msra.mxu0 0.0
    %585 = vmatprep.subr.mxu0 0.0
    %586 = vmatpush2.msra.mxu0 0.0
    %587 = vmatprep.subr.mxu0 0.0
    %588 = vmatpush2.msra.mxu0 0.0
    %589 = vmatprep.mubr.f32.mxu0 0.0
    %590 = vmatmul.mubr.f32.gmra.mxu0 %v523
    %v591 = vpop.f32.mrf.mxu0
    %v592 = vadd.f32 0.0, %v591
    %v593 = vpop.f32.mrf.mxu0
    %v594 = vadd.f32 0.0, %v593
    %595 = vdwg.mxu0
    %v596 = vadd.f32 %v504, %v592
    %v597 = vadd.f32 %v505, %v594
    %v598 = vxor.u32 %v596, 2147483648
    %v599 = vxor.u32 %v597, 2147483648
    %v600 = vmul.f32 %v598, 1.442695
    %v601 = vpow.pop %v600
    %v602 = vmul.f32 %v599, 1.442695
    %v603 = vpow.pop %v602
    %v604 = vadd.f32 %v601, 1.0
    %v605 = vadd.f32 %v603, 1.0
    %v606 = vrcp.pop %v604
    %v607 = vmul.f32 1.0, %v606
    %v608 = vrcp.pop %v605
    %v609 = vmul.f32 1.0, %v608
    %v610 = vtanh.pop %v597
    %v611 = vmul.f32 %v607, %v496
    %613 = vrot.lane.b32.xlu0 %v610, 64
    %v614 = vpop.permute.xlu0 %613
    %v616 = vmul.f32 %v607, %v614
    %618 = vrot.lane.b32.xlu0 %v616, 64
    %v619 = vpop.permute.xlu0 %618
    %v621 = vadd.f32 %v611, %v619
    %v622 = vtanh.pop %v621
    %624 = vrot.lane.b32.xlu0 %v622, 64
    %v625 = vpop.permute.xlu0 %624
    %v627 = vmul.f32 %v609, %v625
    %628 = vst.msk [vmem:[#allocation3 + $0x10] sm:$0xff] %vm271, %v627
    %v629 = vld [vmem:[#allocation2 + $0x30] sm:$0xff]
    %v630 = vld [vmem:[#allocation2 + $0x38] sm:$0xff]
    %v631 = vld [vmem:[#allocation5] sm:$0xff]
    %v632 = vld [vmem:[#allocation5 + $0x8] sm:$0xff]
    %v633 = vld [vmem:[#allocation5 + $0x10] sm:$0xff]
    %v634 = vld [vmem:[#allocation5 + $0x18] sm:$0xff]
    %v635 = vld [vmem:[#allocation5 + $0x20] sm:$0xff]
    %v636 = vld [vmem:[#allocation5 + $0x28] sm:$0xff]
    %v637 = vld [vmem:[#allocation5 + $0x30] sm:$0xff]
    %v638 = vld [vmem:[#allocation5 + $0x38] sm:$0xff]
    %v639 = vld [vmem:[#allocation5 + $0x40] sm:$0xff]
    %v640 = vld [vmem:[#allocation5 + $0x48] sm:$0xff]
    %v641 = vld [vmem:[#allocation5 + $0x50] sm:$0xff]
    %v642 = vld [vmem:[#allocation5 + $0x58] sm:$0xff]
    %v643 = vld [vmem:[#allocation5 + $0x60] sm:$0xff]
    %v644 = vld [vmem:[#allocation5 + $0x68] sm:$0xff]
    %v645 = vld [vmem:[#allocation5 + $0x70] sm:$0xff]
    %v646 = vld [vmem:[#allocation5 + $0x78] sm:$0xff]
    %v648 = vsel %vm271, %v627, 0
    %650 = vmatprep.subr.mxu0 0.0
    %651 = vmatpush1.msra.mxu0 0.0
    %652 = vmatprep.subr.mxu0 0.0
    %653 = vmatpush1.msra.mxu0 0.0
    %654 = vmatprep.subr.mxu0 0.0
    %655 = vmatpush1.msra.mxu0 0.0
    %656 = vmatprep.subr.mxu0 0.0
    %657 = vmatpush1.msra.mxu0 0.0
    %658 = vmatprep.subr.mxu0 0.0
    %659 = vmatpush1.msra.mxu0 0.0
    %660 = vmatprep.subr.mxu0 0.0
    %661 = vmatpush1.msra.mxu0 0.0
    %662 = vmatprep.subr.mxu0 0.0
    %663 = vmatpush1.msra.mxu0 0.0
    %664 = vmatprep.subr.mxu0 0.0
    %665 = vmatpush1.msra.mxu0 0.0
    %666 = vmatprep.subr.mxu0 %v646
    %667 = vmatpush1.msra.mxu0 %v645
    %668 = vmatprep.subr.mxu0 %v644
    %669 = vmatpush1.msra.mxu0 %v643
    %670 = vmatprep.subr.mxu0 %v642
    %671 = vmatpush1.msra.mxu0 %v641
    %672 = vmatprep.subr.mxu0 %v640
    %673 = vmatpush1.msra.mxu0 %v639
    %674 = vmatprep.subr.mxu0 %v638
    %675 = vmatpush1.msra.mxu0 %v637
    %676 = vmatprep.subr.mxu0 %v636
    %677 = vmatpush1.msra.mxu0 %v635
    %678 = vmatprep.subr.mxu0 %v634
    %679 = vmatpush1.msra.mxu0 %v633
    %680 = vmatprep.subr.mxu0 %v632
    %681 = vmatpush1.msra.mxu0 %v631
    %682 = vmatprep.subr.mxu0 0.0
    %683 = vmatpush2.msra.mxu0 0.0
    %684 = vmatprep.subr.mxu0 0.0
    %685 = vmatpush2.msra.mxu0 0.0
    %686 = vmatprep.subr.mxu0 0.0
    %687 = vmatpush2.msra.mxu0 0.0
    %688 = vmatprep.subr.mxu0 0.0
    %689 = vmatpush2.msra.mxu0 0.0
    %690 = vmatprep.subr.mxu0 0.0
    %691 = vmatpush2.msra.mxu0 0.0
    %692 = vmatprep.subr.mxu0 0.0
    %693 = vmatpush2.msra.mxu0 0.0
    %694 = vmatprep.subr.mxu0 0.0
    %695 = vmatpush2.msra.mxu0 0.0
    %696 = vmatprep.subr.mxu0 0.0
    %697 = vmatpush2.msra.mxu0 0.0
    %698 = vmatprep.subr.mxu0 0.0
    %699 = vmatpush2.msra.mxu0 0.0
    %700 = vmatprep.subr.mxu0 0.0
    %701 = vmatpush2.msra.mxu0 0.0
    %702 = vmatprep.subr.mxu0 0.0
    %703 = vmatpush2.msra.mxu0 0.0
    %704 = vmatprep.subr.mxu0 0.0
    %705 = vmatpush2.msra.mxu0 0.0
    %706 = vmatprep.subr.mxu0 0.0
    %707 = vmatpush2.msra.mxu0 0.0
    %708 = vmatprep.subr.mxu0 0.0
    %709 = vmatpush2.msra.mxu0 0.0
    %710 = vmatprep.subr.mxu0 0.0
    %711 = vmatpush2.msra.mxu0 0.0
    %712 = vmatprep.subr.mxu0 0.0
    %713 = vmatpush2.msra.mxu0 0.0
    %714 = vmatprep.mubr.f32.mxu0 0.0
    %715 = vmatmul.mubr.f32.gmra.mxu0 %v648
    %v716 = vpop.f32.mrf.mxu0
    %v717 = vadd.f32 0.0, %v716
    %v718 = vpop.f32.mrf.mxu0
    %v719 = vadd.f32 0.0, %v718
    %720 = vdwg.mxu0
    %v721 = vadd.f32 %v629, %v717
    %v722 = vadd.f32 %v630, %v719
    %v723 = vxor.u32 %v721, 2147483648
    %v724 = vxor.u32 %v722, 2147483648
    %v725 = vmul.f32 %v723, 1.442695
    %v726 = vpow.pop %v725
    %v727 = vmul.f32 %v724, 1.442695
    %v728 = vpow.pop %v727
    %v729 = vadd.f32 %v726, 1.0
    %v730 = vadd.f32 %v728, 1.0
    %v731 = vrcp.pop %v729
    %v732 = vmul.f32 1.0, %v731
    %v733 = vrcp.pop %v730
    %v734 = vmul.f32 1.0, %v733
    %v735 = vtanh.pop %v722
    %v736 = vmul.f32 %v732, %v621
    %738 = vrot.lane.b32.xlu0 %v735, 64
    %v739 = vpop.permute.xlu0 %738
    %v741 = vmul.f32 %v732, %v739
    %743 = vrot.lane.b32.xlu0 %v741, 64
    %v744 = vpop.permute.xlu0 %743
    %v746 = vadd.f32 %v736, %v744
    %v747 = vtanh.pop %v746
    %749 = vrot.lane.b32.xlu0 %v747, 64
    %v750 = vpop.permute.xlu0 %749
    %v752 = vmul.f32 %v734, %v750
    %753 = vst.msk [vmem:[#allocation3 + $0x18] sm:$0xff] %vm271, %v752
    %v754 = vld [vmem:[#allocation2 + $0x40] sm:$0xff]
    %v755 = vld [vmem:[#allocation2 + $0x48] sm:$0xff]
    %v756 = vld [vmem:[#allocation5] sm:$0xff]
    %v757 = vld [vmem:[#allocation5 + $0x8] sm:$0xff]
    %v758 = vld [vmem:[#allocation5 + $0x10] sm:$0xff]
    %v759 = vld [vmem:[#allocation5 + $0x18] sm:$0xff]
    %v760 = vld [vmem:[#allocation5 + $0x20] sm:$0xff]
    %v761 = vld [vmem:[#allocation5 + $0x28] sm:$0xff]
    %v762 = vld [vmem:[#allocation5 + $0x30] sm:$0xff]
    %v763 = vld [vmem:[#allocation5 + $0x38] sm:$0xff]
    %v764 = vld [vmem:[#allocation5 + $0x40] sm:$0xff]
    %v765 = vld [vmem:[#allocation5 + $0x48] sm:$0xff]
    %v766 = vld [vmem:[#allocation5 + $0x50] sm:$0xff]
    %v767 = vld [vmem:[#allocation5 + $0x58] sm:$0xff]
    %v768 = vld [vmem:[#allocation5 + $0x60] sm:$0xff]
    %v769 = vld [vmem:[#allocation5 + $0x68] sm:$0xff]
    %v770 = vld [vmem:[#allocation5 + $0x70] sm:$0xff]
    %v771 = vld [vmem:[#allocation5 + $0x78] sm:$0xff]
    %v773 = vsel %vm271, %v752, 0
    %775 = vmatprep.subr.mxu0 0.0
    %776 = vmatpush1.msra.mxu0 0.0
    %777 = vmatprep.subr.mxu0 0.0
    %778 = vmatpush1.msra.mxu0 0.0
    %779 = vmatprep.subr.mxu0 0.0
    %780 = vmatpush1.msra.mxu0 0.0
    %781 = vmatprep.subr.mxu0 0.0
    %782 = vmatpush1.msra.mxu0 0.0
    %783 = vmatprep.subr.mxu0 0.0
    %784 = vmatpush1.msra.mxu0 0.0
    %785 = vmatprep.subr.mxu0 0.0
    %786 = vmatpush1.msra.mxu0 0.0
    %787 = vmatprep.subr.mxu0 0.0
    %788 = vmatpush1.msra.mxu0 0.0
    %789 = vmatprep.subr.mxu0 0.0
    %790 = vmatpush1.msra.mxu0 0.0
    %791 = vmatprep.subr.mxu0 %v771
    %792 = vmatpush1.msra.mxu0 %v770
    %793 = vmatprep.subr.mxu0 %v769
    %794 = vmatpush1.msra.mxu0 %v768
    %795 = vmatprep.subr.mxu0 %v767
    %796 = vmatpush1.msra.mxu0 %v766
    %797 = vmatprep.subr.mxu0 %v765
    %798 = vmatpush1.msra.mxu0 %v764
    %799 = vmatprep.subr.mxu0 %v763
    %800 = vmatpush1.msra.mxu0 %v762
    %801 = vmatprep.subr.mxu0 %v761
    %802 = vmatpush1.msra.mxu0 %v760
    %803 = vmatprep.subr.mxu0 %v759
    %804 = vmatpush1.msra.mxu0 %v758
    %805 = vmatprep.subr.mxu0 %v757
    %806 = vmatpush1.msra.mxu0 %v756
    %807 = vmatprep.subr.mxu0 0.0
    %808 = vmatpush2.msra.mxu0 0.0
    %809 = vmatprep.subr.mxu0 0.0
    %810 = vmatpush2.msra.mxu0 0.0
    %811 = vmatprep.subr.mxu0 0.0
    %812 = vmatpush2.msra.mxu0 0.0
    %813 = vmatprep.subr.mxu0 0.0
    %814 = vmatpush2.msra.mxu0 0.0
    %815 = vmatprep.subr.mxu0 0.0
    %816 = vmatpush2.msra.mxu0 0.0
    %817 = vmatprep.subr.mxu0 0.0
    %818 = vmatpush2.msra.mxu0 0.0
    %819 = vmatprep.subr.mxu0 0.0
    %820 = vmatpush2.msra.mxu0 0.0
    %821 = vmatprep.subr.mxu0 0.0
    %822 = vmatpush2.msra.mxu0 0.0
    %823 = vmatprep.subr.mxu0 0.0
    %824 = vmatpush2.msra.mxu0 0.0
    %825 = vmatprep.subr.mxu0 0.0
    %826 = vmatpush2.msra.mxu0 0.0
    %827 = vmatprep.subr.mxu0 0.0
    %828 = vmatpush2.msra.mxu0 0.0
    %829 = vmatprep.subr.mxu0 0.0
    %830 = vmatpush2.msra.mxu0 0.0
    %831 = vmatprep.subr.mxu0 0.0
    %832 = vmatpush2.msra.mxu0 0.0
    %833 = vmatprep.subr.mxu0 0.0
    %834 = vmatpush2.msra.mxu0 0.0
    %835 = vmatprep.subr.mxu0 0.0
    %836 = vmatpush2.msra.mxu0 0.0
    %837 = vmatprep.subr.mxu0 0.0
    %838 = vmatpush2.msra.mxu0 0.0
    %839 = vmatprep.mubr.f32.mxu0 0.0
    %840 = vmatmul.mubr.f32.gmra.mxu0 %v773
    %v841 = vpop.f32.mrf.mxu0
    %v842 = vadd.f32 0.0, %v841
    %v843 = vpop.f32.mrf.mxu0
    %v844 = vadd.f32 0.0, %v843
    %845 = vdwg.mxu0
    %v846 = vadd.f32 %v754, %v842
    %v847 = vadd.f32 %v755, %v844
    %v848 = vxor.u32 %v846, 2147483648
    %v849 = vxor.u32 %v847, 2147483648
    %v850 = vmul.f32 %v848, 1.442695
    %v851 = vpow.pop %v850
    %v852 = vmul.f32 %v849, 1.442695
    %v853 = vpow.pop %v852
    %v854 = vadd.f32 %v851, 1.0
    %v855 = vadd.f32 %v853, 1.0
    %v856 = vrcp.pop %v854
    %v857 = vmul.f32 1.0, %v856
    %v858 = vrcp.pop %v855
    %v859 = vmul.f32 1.0, %v858
    %v860 = vtanh.pop %v847
    %v861 = vmul.f32 %v857, %v746
    %863 = vrot.lane.b32.xlu0 %v860, 64
    %v864 = vpop.permute.xlu0 %863
    %v866 = vmul.f32 %v857, %v864
    %868 = vrot.lane.b32.xlu0 %v866, 64
    %v869 = vpop.permute.xlu0 %868
    %v871 = vadd.f32 %v861, %v869
    %v872 = vtanh.pop %v871
    %874 = vrot.lane.b32.xlu0 %v872, 64
    %v875 = vpop.permute.xlu0 %874
    %v877 = vmul.f32 %v859, %v875
    %878 = vst.msk [vmem:[#allocation3 + $0x20] sm:$0xff] %vm271, %v877
    %v879 = vld [vmem:[#allocation2 + $0x50] sm:$0xff]
    %v880 = vld [vmem:[#allocation2 + $0x58] sm:$0xff]
    %v881 = vld [vmem:[#allocation5] sm:$0xff]
    %v882 = vld [vmem:[#allocation5 + $0x8] sm:$0xff]
    %v883 = vld [vmem:[#allocation5 + $0x10] sm:$0xff]
    %v884 = vld [vmem:[#allocation5 + $0x18] sm:$0xff]
    %v885 = vld [vmem:[#allocation5 + $0x20] sm:$0xff]
    %v886 = vld [vmem:[#allocation5 + $0x28] sm:$0xff]
    %v887 = vld [vmem:[#allocation5 + $0x30] sm:$0xff]
    %v888 = vld [vmem:[#allocation5 + $0x38] sm:$0xff]
    %v889 = vld [vmem:[#allocation5 + $0x40] sm:$0xff]
    %v890 = vld [vmem:[#allocation5 + $0x48] sm:$0xff]
    %v891 = vld [vmem:[#allocation5 + $0x50] sm:$0xff]
    %v892 = vld [vmem:[#allocation5 + $0x58] sm:$0xff]
    %v893 = vld [vmem:[#allocation5 + $0x60] sm:$0xff]
    %v894 = vld [vmem:[#allocation5 + $0x68] sm:$0xff]
    %v895 = vld [vmem:[#allocation5 + $0x70] sm:$0xff]
    %v896 = vld [vmem:[#allocation5 + $0x78] sm:$0xff]
    %v898 = vsel %vm271, %v877, 0
    %900 = vmatprep.subr.mxu0 0.0
    %901 = vmatpush1.msra.mxu0 0.0
    %902 = vmatprep.subr.mxu0 0.0
    %903 = vmatpush1.msra.mxu0 0.0
    %904 = vmatprep.subr.mxu0 0.0
    %905 = vmatpush1.msra.mxu0 0.0
    %906 = vmatprep.subr.mxu0 0.0
    %907 = vmatpush1.msra.mxu0 0.0
    %908 = vmatprep.subr.mxu0 0.0
    %909 = vmatpush1.msra.mxu0 0.0
    %910 = vmatprep.subr.mxu0 0.0
    %911 = vmatpush1.msra.mxu0 0.0
    %912 = vmatprep.subr.mxu0 0.0
    %913 = vmatpush1.msra.mxu0 0.0
    %914 = vmatprep.subr.mxu0 0.0
    %915 = vmatpush1.msra.mxu0 0.0
    %916 = vmatprep.subr.mxu0 %v896
    %917 = vmatpush1.msra.mxu0 %v895
    %918 = vmatprep.subr.mxu0 %v894
    %919 = vmatpush1.msra.mxu0 %v893
    %920 = vmatprep.subr.mxu0 %v892
    %921 = vmatpush1.msra.mxu0 %v891
    %922 = vmatprep.subr.mxu0 %v890
    %923 = vmatpush1.msra.mxu0 %v889
    %924 = vmatprep.subr.mxu0 %v888
    %925 = vmatpush1.msra.mxu0 %v887
    %926 = vmatprep.subr.mxu0 %v886
    %927 = vmatpush1.msra.mxu0 %v885
    %928 = vmatprep.subr.mxu0 %v884
    %929 = vmatpush1.msra.mxu0 %v883
    %930 = vmatprep.subr.mxu0 %v882
    %931 = vmatpush1.msra.mxu0 %v881
    %932 = vmatprep.subr.mxu0 0.0
    %933 = vmatpush2.msra.mxu0 0.0
    %934 = vmatprep.subr.mxu0 0.0
    %935 = vmatpush2.msra.mxu0 0.0
    %936 = vmatprep.subr.mxu0 0.0
    %937 = vmatpush2.msra.mxu0 0.0
    %938 = vmatprep.subr.mxu0 0.0
    %939 = vmatpush2.msra.mxu0 0.0
    %940 = vmatprep.subr.mxu0 0.0
    %941 = vmatpush2.msra.mxu0 0.0
    %942 = vmatprep.subr.mxu0 0.0
    %943 = vmatpush2.msra.mxu0 0.0
    %944 = vmatprep.subr.mxu0 0.0
    %945 = vmatpush2.msra.mxu0 0.0
    %946 = vmatprep.subr.mxu0 0.0
    %947 = vmatpush2.msra.mxu0 0.0
    %948 = vmatprep.subr.mxu0 0.0
    %949 = vmatpush2.msra.mxu0 0.0
    %950 = vmatprep.subr.mxu0 0.0
    %951 = vmatpush2.msra.mxu0 0.0
    %952 = vmatprep.subr.mxu0 0.0
    %953 = vmatpush2.msra.mxu0 0.0
    %954 = vmatprep.subr.mxu0 0.0
    %955 = vmatpush2.msra.mxu0 0.0
    %956 = vmatprep.subr.mxu0 0.0
    %957 = vmatpush2.msra.mxu0 0.0
    %958 = vmatprep.subr.mxu0 0.0
    %959 = vmatpush2.msra.mxu0 0.0
    %960 = vmatprep.subr.mxu0 0.0
    %961 = vmatpush2.msra.mxu0 0.0
    %962 = vmatprep.subr.mxu0 0.0
    %963 = vmatpush2.msra.mxu0 0.0
    %964 = vmatprep.mubr.f32.mxu0 0.0
    %965 = vmatmul.mubr.f32.gmra.mxu0 %v898
    %v966 = vpop.f32.mrf.mxu0
    %v967 = vadd.f32 0.0, %v966
    %v968 = vpop.f32.mrf.mxu0
    %v969 = vadd.f32 0.0, %v968
    %970 = vdwg.mxu0
    %v971 = vadd.f32 %v879, %v967
    %v972 = vadd.f32 %v880, %v969
    %v973 = vxor.u32 %v971, 2147483648
    %v974 = vxor.u32 %v972, 2147483648
    %v975 = vmul.f32 %v973, 1.442695
    %v976 = vpow.pop %v975
    %v977 = vmul.f32 %v974, 1.442695
    %v978 = vpow.pop %v977
    %v979 = vadd.f32 %v976, 1.0
    %v980 = vadd.f32 %v978, 1.0
    %v981 = vrcp.pop %v979
    %v982 = vmul.f32 1.0, %v981
    %v983 = vrcp.pop %v980
    %v984 = vmul.f32 1.0, %v983
    %v985 = vtanh.pop %v972
    %v986 = vmul.f32 %v982, %v871
    %988 = vrot.lane.b32.xlu0 %v985, 64
    %v989 = vpop.permute.xlu0 %988
    %v991 = vmul.f32 %v982, %v989
    %993 = vrot.lane.b32.xlu0 %v991, 64
    %v994 = vpop.permute.xlu0 %993
    %v996 = vadd.f32 %v986, %v994
    %v997 = vtanh.pop %v996
    %999 = vrot.lane.b32.xlu0 %v997, 64
    %v1000 = vpop.permute.xlu0 %999
    %v1002 = vmul.f32 %v984, %v1000
    %1003 = vst.msk [vmem:[#allocation3 + $0x28] sm:$0xff] %vm271, %v1002
    %v1004 = vld [vmem:[#allocation2 + $0x60] sm:$0xff]
    %v1005 = vld [vmem:[#allocation2 + $0x68] sm:$0xff]
    %v1006 = vld [vmem:[#allocation5] sm:$0xff]
    %v1007 = vld [vmem:[#allocation5 + $0x8] sm:$0xff]
    %v1008 = vld [vmem:[#allocation5 + $0x10] sm:$0xff]
    %v1009 = vld [vmem:[#allocation5 + $0x18] sm:$0xff]
    %v1010 = vld [vmem:[#allocation5 + $0x20] sm:$0xff]
    %v1011 = vld [vmem:[#allocation5 + $0x28] sm:$0xff]
    %v1012 = vld [vmem:[#allocation5 + $0x30] sm:$0xff]
    %v1013 = vld [vmem:[#allocation5 + $0x38] sm:$0xff]
    %v1014 = vld [vmem:[#allocation5 + $0x40] sm:$0xff]
    %v1015 = vld [vmem:[#allocation5 + $0x48] sm:$0xff]
    %v1016 = vld [vmem:[#allocation5 + $0x50] sm:$0xff]
    %v1017 = vld [vmem:[#allocation5 + $0x58] sm:$0xff]
    %v1018 = vld [vmem:[#allocation5 + $0x60] sm:$0xff]
    %v1019 = vld [vmem:[#allocation5 + $0x68] sm:$0xff]
    %v1020 = vld [vmem:[#allocation5 + $0x70] sm:$0xff]
    %v1021 = vld [vmem:[#allocation5 + $0x78] sm:$0xff]
    %v1023 = vsel %vm271, %v1002, 0
    %1025 = vmatprep.subr.mxu0 0.0
    %1026 = vmatpush1.msra.mxu0 0.0
    %1027 = vmatprep.subr.mxu0 0.0
    %1028 = vmatpush1.msra.mxu0 0.0
    %1029 = vmatprep.subr.mxu0 0.0
    %1030 = vmatpush1.msra.mxu0 0.0
    %1031 = vmatprep.subr.mxu0 0.0
    %1032 = vmatpush1.msra.mxu0 0.0
    %1033 = vmatprep.subr.mxu0 0.0
    %1034 = vmatpush1.msra.mxu0 0.0
    %1035 = vmatprep.subr.mxu0 0.0
    %1036 = vmatpush1.msra.mxu0 0.0
    %1037 = vmatprep.subr.mxu0 0.0
    %1038 = vmatpush1.msra.mxu0 0.0
    %1039 = vmatprep.subr.mxu0 0.0
    %1040 = vmatpush1.msra.mxu0 0.0
    %1041 = vmatprep.subr.mxu0 %v1021
    %1042 = vmatpush1.msra.mxu0 %v1020
    %1043 = vmatprep.subr.mxu0 %v1019
    %1044 = vmatpush1.msra.mxu0 %v1018
    %1045 = vmatprep.subr.mxu0 %v1017
    %1046 = vmatpush1.msra.mxu0 %v1016
    %1047 = vmatprep.subr.mxu0 %v1015
    %1048 = vmatpush1.msra.mxu0 %v1014
    %1049 = vmatprep.subr.mxu0 %v1013
    %1050 = vmatpush1.msra.mxu0 %v1012
    %1051 = vmatprep.subr.mxu0 %v1011
    %1052 = vmatpush1.msra.mxu0 %v1010
    %1053 = vmatprep.subr.mxu0 %v1009
    %1054 = vmatpush1.msra.mxu0 %v1008
    %1055 = vmatprep.subr.mxu0 %v1007
    %1056 = vmatpush1.msra.mxu0 %v1006
    %1057 = vmatprep.subr.mxu0 0.0
    %1058 = vmatpush2.msra.mxu0 0.0
    %1059 = vmatprep.subr.mxu0 0.0
    %1060 = vmatpush2.msra.mxu0 0.0
    %1061 = vmatprep.subr.mxu0 0.0
    %1062 = vmatpush2.msra.mxu0 0.0
    %1063 = vmatprep.subr.mxu0 0.0
    %1064 = vmatpush2.msra.mxu0 0.0
    %1065 = vmatprep.subr.mxu0 0.0
    %1066 = vmatpush2.msra.mxu0 0.0
    %1067 = vmatprep.subr.mxu0 0.0
    %1068 = vmatpush2.msra.mxu0 0.0
    %1069 = vmatprep.subr.mxu0 0.0
    %1070 = vmatpush2.msra.mxu0 0.0
    %1071 = vmatprep.subr.mxu0 0.0
    %1072 = vmatpush2.msra.mxu0 0.0
    %1073 = vmatprep.subr.mxu0 0.0
    %1074 = vmatpush2.msra.mxu0 0.0
    %1075 = vmatprep.subr.mxu0 0.0
    %1076 = vmatpush2.msra.mxu0 0.0
    %1077 = vmatprep.subr.mxu0 0.0
    %1078 = vmatpush2.msra.mxu0 0.0
    %1079 = vmatprep.subr.mxu0 0.0
    %1080 = vmatpush2.msra.mxu0 0.0
    %1081 = vmatprep.subr.mxu0 0.0
    %1082 = vmatpush2.msra.mxu0 0.0
    %1083 = vmatprep.subr.mxu0 0.0
    %1084 = vmatpush2.msra.mxu0 0.0
    %1085 = vmatprep.subr.mxu0 0.0
    %1086 = vmatpush2.msra.mxu0 0.0
    %1087 = vmatprep.subr.mxu0 0.0
    %1088 = vmatpush2.msra.mxu0 0.0
    %1089 = vmatprep.mubr.f32.mxu0 0.0
    %1090 = vmatmul.mubr.f32.gmra.mxu0 %v1023
    %v1091 = vpop.f32.mrf.mxu0
    %v1092 = vadd.f32 0.0, %v1091
    %v1093 = vpop.f32.mrf.mxu0
    %v1094 = vadd.f32 0.0, %v1093
    %1095 = vdwg.mxu0
    %v1096 = vadd.f32 %v1004, %v1092
    %v1097 = vadd.f32 %v1005, %v1094
    %v1098 = vxor.u32 %v1096, 2147483648
    %v1099 = vxor.u32 %v1097, 2147483648
    %v1100 = vmul.f32 %v1098, 1.442695
    %v1101 = vpow.pop %v1100
    %v1102 = vmul.f32 %v1099, 1.442695
    %v1103 = vpow.pop %v1102
    %v1104 = vadd.f32 %v1101, 1.0
    %v1105 = vadd.f32 %v1103, 1.0
    %v1106 = vrcp.pop %v1104
    %v1107 = vmul.f32 1.0, %v1106
    %v1108 = vrcp.pop %v1105
    %v1109 = vmul.f32 1.0, %v1108
    %v1110 = vtanh.pop %v1097
    %v1111 = vmul.f32 %v1107, %v996
    %1113 = vrot.lane.b32.xlu0 %v1110, 64
    %v1114 = vpop.permute.xlu0 %1113
    %v1116 = vmul.f32 %v1107, %v1114
    %1118 = vrot.lane.b32.xlu0 %v1116, 64
    %v1119 = vpop.permute.xlu0 %1118
    %v1121 = vadd.f32 %v1111, %v1119
    %v1122 = vtanh.pop %v1121
    %1124 = vrot.lane.b32.xlu0 %v1122, 64
    %v1125 = vpop.permute.xlu0 %1124
    %v1127 = vmul.f32 %v1109, %v1125
    %1128 = vst.msk [vmem:[#allocation3 + $0x30] sm:$0xff] %vm271, %v1127
    %v1129 = vld [vmem:[#allocation2 + $0x70] sm:$0xff]
    %v1130 = vld [vmem:[#allocation2 + $0x78] sm:$0xff]
    %v1131 = vld [vmem:[#allocation5] sm:$0xff]
    %v1132 = vld [vmem:[#allocation5 + $0x8] sm:$0xff]
    %v1133 = vld [vmem:[#allocation5 + $0x10] sm:$0xff]
    %v1134 = vld [vmem:[#allocation5 + $0x18] sm:$0xff]
    %v1135 = vld [vmem:[#allocation5 + $0x20] sm:$0xff]
    %v1136 = vld [vmem:[#allocation5 + $0x28] sm:$0xff]
    %v1137 = vld [vmem:[#allocation5 + $0x30] sm:$0xff]
    %v1138 = vld [vmem:[#allocation5 + $0x38] sm:$0xff]
    %v1139 = vld [vmem:[#allocation5 + $0x40] sm:$0xff]
    %v1140 = vld [vmem:[#allocation5 + $0x48] sm:$0xff]
    %v1141 = vld [vmem:[#allocation5 + $0x50] sm:$0xff]
    %v1142 = vld [vmem:[#allocation5 + $0x58] sm:$0xff]
    %v1143 = vld [vmem:[#allocation5 + $0x60] sm:$0xff]
    %v1144 = vld [vmem:[#allocation5 + $0x68] sm:$0xff]
    %v1145 = vld [vmem:[#allocation5 + $0x70] sm:$0xff]
    %v1146 = vld [vmem:[#allocation5 + $0x78] sm:$0xff]
    %v1148 = vsel %vm271, %v1127, 0
    %1150 = vmatprep.subr.mxu0 0.0
    %1151 = vmatpush1.msra.mxu0 0.0
    %1152 = vmatprep.subr.mxu0 0.0
    %1153 = vmatpush1.msra.mxu0 0.0
    %1154 = vmatprep.subr.mxu0 0.0
    %1155 = vmatpush1.msra.mxu0 0.0
    %1156 = vmatprep.subr.mxu0 0.0
    %1157 = vmatpush1.msra.mxu0 0.0
    %1158 = vmatprep.subr.mxu0 0.0
    %1159 = vmatpush1.msra.mxu0 0.0
    %1160 = vmatprep.subr.mxu0 0.0
    %1161 = vmatpush1.msra.mxu0 0.0
    %1162 = vmatprep.subr.mxu0 0.0
    %1163 = vmatpush1.msra.mxu0 0.0
    %1164 = vmatprep.subr.mxu0 0.0
    %1165 = vmatpush1.msra.mxu0 0.0
    %1166 = vmatprep.subr.mxu0 %v1146
    %1167 = vmatpush1.msra.mxu0 %v1145
    %1168 = vmatprep.subr.mxu0 %v1144
    %1169 = vmatpush1.msra.mxu0 %v1143
    %1170 = vmatprep.subr.mxu0 %v1142
    %1171 = vmatpush1.msra.mxu0 %v1141
    %1172 = vmatprep.subr.mxu0 %v1140
    %1173 = vmatpush1.msra.mxu0 %v1139
    %1174 = vmatprep.subr.mxu0 %v1138
    %1175 = vmatpush1.msra.mxu0 %v1137
    %1176 = vmatprep.subr.mxu0 %v1136
    %1177 = vmatpush1.msra.mxu0 %v1135
    %1178 = vmatprep.subr.mxu0 %v1134
    %1179 = vmatpush1.msra.mxu0 %v1133
    %1180 = vmatprep.subr.mxu0 %v1132
    %1181 = vmatpush1.msra.mxu0 %v1131
    %1182 = vmatprep.subr.mxu0 0.0
    %1183 = vmatpush2.msra.mxu0 0.0
    %1184 = vmatprep.subr.mxu0 0.0
    %1185 = vmatpush2.msra.mxu0 0.0
    %1186 = vmatprep.subr.mxu0 0.0
    %1187 = vmatpush2.msra.mxu0 0.0
    %1188 = vmatprep.subr.mxu0 0.0
    %1189 = vmatpush2.msra.mxu0 0.0
    %1190 = vmatprep.subr.mxu0 0.0
    %1191 = vmatpush2.msra.mxu0 0.0
    %1192 = vmatprep.subr.mxu0 0.0
    %1193 = vmatpush2.msra.mxu0 0.0
    %1194 = vmatprep.subr.mxu0 0.0
    %1195 = vmatpush2.msra.mxu0 0.0
    %1196 = vmatprep.subr.mxu0 0.0
    %1197 = vmatpush2.msra.mxu0 0.0
    %1198 = vmatprep.subr.mxu0 0.0
    %1199 = vmatpush2.msra.mxu0 0.0
    %1200 = vmatprep.subr.mxu0 0.0
    %1201 = vmatpush2.msra.mxu0 0.0
    %1202 = vmatprep.subr.mxu0 0.0
    %1203 = vmatpush2.msra.mxu0 0.0
    %1204 = vmatprep.subr.mxu0 0.0
    %1205 = vmatpush2.msra.mxu0 0.0
    %1206 = vmatprep.subr.mxu0 0.0
    %1207 = vmatpush2.msra.mxu0 0.0
    %1208 = vmatprep.subr.mxu0 0.0
    %1209 = vmatpush2.msra.mxu0 0.0
    %1210 = vmatprep.subr.mxu0 0.0
    %1211 = vmatpush2.msra.mxu0 0.0
    %1212 = vmatprep.subr.mxu0 0.0
    %1213 = vmatpush2.msra.mxu0 0.0
    %1214 = vmatprep.mubr.f32.mxu0 0.0
    %1215 = vmatmul.mubr.f32.gmra.mxu0 %v1148
    %v1216 = vpop.f32.mrf.mxu0
    %v1217 = vadd.f32 0.0, %v1216
    %v1218 = vpop.f32.mrf.mxu0
    %v1219 = vadd.f32 0.0, %v1218
    %1220 = vdwg.mxu0
    %v1221 = vadd.f32 %v1129, %v1217
    %v1222 = vadd.f32 %v1130, %v1219
    %v1223 = vxor.u32 %v1221, 2147483648
    %v1224 = vxor.u32 %v1222, 2147483648
    %v1225 = vmul.f32 %v1223, 1.442695
    %v1226 = vpow.pop %v1225
    %v1227 = vmul.f32 %v1224, 1.442695
    %v1228 = vpow.pop %v1227
    %v1229 = vadd.f32 %v1226, 1.0
    %v1230 = vadd.f32 %v1228, 1.0
    %v1231 = vrcp.pop %v1229
    %v1232 = vmul.f32 1.0, %v1231
    %v1233 = vrcp.pop %v1230
    %v1234 = vmul.f32 1.0, %v1233
    %v1235 = vtanh.pop %v1222
    %v1236 = vmul.f32 %v1232, %v1121
    %1238 = vrot.lane.b32.xlu0 %v1235, 64
    %v1239 = vpop.permute.xlu0 %1238
    %v1241 = vmul.f32 %v1232, %v1239
    %1243 = vrot.lane.b32.xlu0 %v1241, 64
    %v1244 = vpop.permute.xlu0 %1243
    %v1246 = vadd.f32 %v1236, %v1244
    %v1247 = vtanh.pop %v1246
    %1249 = vrot.lane.b32.xlu0 %v1247, 64
    %v1250 = vpop.permute.xlu0 %1249
    %v1252 = vmul.f32 %v1234, %v1250
    %1253 = vst.msk [vmem:[#allocation3 + $0x38] sm:$0xff] %vm271, %v1252
    %v1254 = vld [vmem:[#allocation3] sm:$0xff]
    %v1255 = vld [vmem:[#allocation3 + $0x8] sm:$0xff]
    %v1256 = vld [vmem:[#allocation3 + $0x10] sm:$0xff]
    %v1257 = vld [vmem:[#allocation3 + $0x18] sm:$0xff]
    %v1258 = vld [vmem:[#allocation3 + $0x20] sm:$0xff]
    %v1259 = vld [vmem:[#allocation3 + $0x28] sm:$0xff]
    %v1260 = vld [vmem:[#allocation3 + $0x30] sm:$0xff]
    %v1261 = vld [vmem:[#allocation3 + $0x38] sm:$0xff]
    %v1262 = vld [vmem:[#allocation7] sm:$0xff]
    %v1263 = vld [vmem:[#allocation7 + $0x8] sm:$0xff]
    %v1264 = vld [vmem:[#allocation7 + $0x10] sm:$0xff]
    %v1265 = vld [vmem:[#allocation7 + $0x18] sm:$0xff]
    %v1266 = vld [vmem:[#allocation7 + $0x20] sm:$0xff]
    %v1267 = vld [vmem:[#allocation7 + $0x28] sm:$0xff]
    %v1268 = vld [vmem:[#allocation7 + $0x30] sm:$0xff]
    %v1269 = vld [vmem:[#allocation7 + $0x38] sm:$0xff]
    %v1270 = vld [vmem:[#allocation7 + $0x40] sm:$0xff]
    %v1271 = vld [vmem:[#allocation7 + $0x48] sm:$0xff]
    %v1272 = vld [vmem:[#allocation7 + $0x50] sm:$0xff]
    %v1273 = vld [vmem:[#allocation7 + $0x58] sm:$0xff]
    %v1274 = vld [vmem:[#allocation7 + $0x60] sm:$0xff]
    %v1275 = vld [vmem:[#allocation7 + $0x68] sm:$0xff]
    %v1276 = vld [vmem:[#allocation7 + $0x70] sm:$0xff]
    %v1277 = vld [vmem:[#allocation7 + $0x78] sm:$0xff]
    %v1278 = vld [vmem:[%s6] sm:$0x3]
    %v1280 = vlaneseq
    %v1281 = vshrl.u32 %v1280, 7
    %v1282 = vsub.s32 0, %v1281
    %v1283 = vrot.slane %v1278, %v1282
    %v1284 = vlaneseq
    %v1285 = vshrl.u32 %v1284, 7
    %v1286 = vsub.s32 1, %v1285
    %v1287 = vrot.slane %v1278, %v1286
    %v1291 = vsel %vm271, %v1254, 0
    %v1294 = vsel %vm271, %v1255, 0
    %v1297 = vsel %vm271, %v1256, 0
    %v1300 = vsel %vm271, %v1257, 0
    %v1303 = vsel %vm271, %v1258, 0
    %v1306 = vsel %vm271, %v1259, 0
    %v1309 = vsel %vm271, %v1260, 0
    %v1312 = vsel %vm271, %v1261, 0
    %1314 = vmatprep.subr.mxu0 0.0
    %1315 = vmatpush1.msra.mxu0 0.0
    %1316 = vmatprep.subr.mxu0 0.0
    %1317 = vmatpush1.msra.mxu0 0.0
    %1318 = vmatprep.subr.mxu0 0.0
    %1319 = vmatpush1.msra.mxu0 0.0
    %1320 = vmatprep.subr.mxu0 0.0
    %1321 = vmatpush1.msra.mxu0 0.0
    %1322 = vmatprep.subr.mxu0 0.0
    %1323 = vmatpush1.msra.mxu0 0.0
    %1324 = vmatprep.subr.mxu0 0.0
    %1325 = vmatpush1.msra.mxu0 0.0
    %1326 = vmatprep.subr.mxu0 0.0
    %1327 = vmatpush1.msra.mxu0 0.0
    %1328 = vmatprep.subr.mxu0 0.0
    %1329 = vmatpush1.msra.mxu0 0.0
    %1330 = vmatprep.subr.mxu0 %v1277
    %1331 = vmatpush1.msra.mxu0 %v1276
    %1332 = vmatprep.subr.mxu0 %v1275
    %1333 = vmatpush1.msra.mxu0 %v1274
    %1334 = vmatprep.subr.mxu0 %v1273
    %1335 = vmatpush1.msra.mxu0 %v1272
    %1336 = vmatprep.subr.mxu0 %v1271
    %1337 = vmatpush1.msra.mxu0 %v1270
    %1338 = vmatprep.subr.mxu0 %v1269
    %1339 = vmatpush1.msra.mxu0 %v1268
    %1340 = vmatprep.subr.mxu0 %v1267
    %1341 = vmatpush1.msra.mxu0 %v1266
    %1342 = vmatprep.subr.mxu0 %v1265
    %1343 = vmatpush1.msra.mxu0 %v1264
    %1344 = vmatprep.subr.mxu0 %v1263
    %1345 = vmatpush1.msra.mxu0 %v1262
    %1346 = vmatprep.subr.mxu0 0.0
    %1347 = vmatpush2.msra.mxu0 0.0
    %1348 = vmatprep.subr.mxu0 0.0
    %1349 = vmatpush2.msra.mxu0 0.0
    %1350 = vmatprep.subr.mxu0 0.0
    %1351 = vmatpush2.msra.mxu0 0.0
    %1352 = vmatprep.subr.mxu0 0.0
    %1353 = vmatpush2.msra.mxu0 0.0
    %1354 = vmatprep.subr.mxu0 0.0
    %1355 = vmatpush2.msra.mxu0 0.0
    %1356 = vmatprep.subr.mxu0 0.0
    %1357 = vmatpush2.msra.mxu0 0.0
    %1358 = vmatprep.subr.mxu0 0.0
    %1359 = vmatpush2.msra.mxu0 0.0
    %1360 = vmatprep.subr.mxu0 0.0
    %1361 = vmatpush2.msra.mxu0 0.0
    %1362 = vmatprep.subr.mxu0 0.0
    %1363 = vmatpush2.msra.mxu0 0.0
    %1364 = vmatprep.subr.mxu0 0.0
    %1365 = vmatpush2.msra.mxu0 0.0
    %1366 = vmatprep.subr.mxu0 0.0
    %1367 = vmatpush2.msra.mxu0 0.0
    %1368 = vmatprep.subr.mxu0 0.0
    %1369 = vmatpush2.msra.mxu0 0.0
    %1370 = vmatprep.subr.mxu0 0.0
    %1371 = vmatpush2.msra.mxu0 0.0
    %1372 = vmatprep.subr.mxu0 0.0
    %1373 = vmatpush2.msra.mxu0 0.0
    %1374 = vmatprep.subr.mxu0 0.0
    %1375 = vmatpush2.msra.mxu0 0.0
    %1376 = vmatprep.subr.mxu0 0.0
    %1377 = vmatpush2.msra.mxu0 0.0
    %1378 = vmatprep.mubr.f32.mxu0 0.0
    %1379 = vmatmul.mubr.f32.gmra.mxu0 %v1291
    %v1380 = vpop.f32.mrf.mxu0
    %v1381 = vadd.f32 %v1283, %v1380
    %v1382 = vpop.f32.mrf.mxu0
    %v1383 = vadd.f32 %v1287, %v1382
    %1384 = vmatprep.mubr.f32.mxu0 0.0
    %1385 = vmatmul.mubr.f32.gmra.mxu0 %v1294
    %v1386 = vpop.f32.mrf.mxu0
    %v1387 = vadd.f32 %v1283, %v1386
    %v1388 = vpop.f32.mrf.mxu0
    %v1389 = vadd.f32 %v1287, %v1388
    %1390 = vmatprep.mubr.f32.mxu0 0.0
    %1391 = vmatmul.mubr.f32.gmra.mxu0 %v1297
    %v1392 = vpop.f32.mrf.mxu0
    %v1393 = vadd.f32 %v1283, %v1392
    %v1394 = vpop.f32.mrf.mxu0
    %v1395 = vadd.f32 %v1287, %v1394
    %1396 = vmatprep.mubr.f32.mxu0 0.0
    %1397 = vmatmul.mubr.f32.gmra.mxu0 %v1300
    %v1398 = vpop.f32.mrf.mxu0
    %v1399 = vadd.f32 %v1283, %v1398
    %v1400 = vpop.f32.mrf.mxu0
    %v1401 = vadd.f32 %v1287, %v1400
    %1402 = vmatprep.mubr.f32.mxu0 0.0
    %1403 = vmatmul.mubr.f32.gmra.mxu0 %v1303
    %v1404 = vpop.f32.mrf.mxu0
    %v1405 = vadd.f32 %v1283, %v1404
    %v1406 = vpop.f32.mrf.mxu0
    %v1407 = vadd.f32 %v1287, %v1406
    %1408 = vmatprep.mubr.f32.mxu0 0.0
    %1409 = vmatmul.mubr.f32.gmra.mxu0 %v1306
    %v1410 = vpop.f32.mrf.mxu0
    %v1411 = vadd.f32 %v1283, %v1410
    %v1412 = vpop.f32.mrf.mxu0
    %v1413 = vadd.f32 %v1287, %v1412
    %1414 = vmatprep.mubr.f32.mxu0 0.0
    %1415 = vmatmul.mubr.f32.gmra.mxu0 %v1309
    %v1416 = vpop.f32.mrf.mxu0
    %v1417 = vadd.f32 %v1283, %v1416
    %v1418 = vpop.f32.mrf.mxu0
    %v1419 = vadd.f32 %v1287, %v1418
    %1420 = vmatprep.mubr.f32.mxu0 0.0
    %1421 = vmatmul.mubr.f32.gmra.mxu0 %v1312
    %v1422 = vpop.f32.mrf.mxu0
    %v1423 = vadd.f32 %v1283, %v1422
    %v1424 = vpop.f32.mrf.mxu0
    %v1425 = vadd.f32 %v1287, %v1424
    %1426 = vdwg.mxu0
    %1427 = vst [vmem:[#allocation2] sm:$0xff] %v1381
    %1428 = vst [vmem:[#allocation2 + $0x8] sm:$0xff] %v1383
    %1429 = vst [vmem:[#allocation2 + $0x10] sm:$0xff] %v1387
    %1430 = vst [vmem:[#allocation2 + $0x18] sm:$0xff] %v1389
    %1431 = vst [vmem:[#allocation2 + $0x20] sm:$0xff] %v1393
    %1432 = vst [vmem:[#allocation2 + $0x28] sm:$0xff] %v1395
    %1433 = vst [vmem:[#allocation2 + $0x30] sm:$0xff] %v1399
    %1434 = vst [vmem:[#allocation2 + $0x38] sm:$0xff] %v1401
    %1435 = vst [vmem:[#allocation2 + $0x40] sm:$0xff] %v1405
    %1436 = vst [vmem:[#allocation2 + $0x48] sm:$0xff] %v1407
    %1437 = vst [vmem:[#allocation2 + $0x50] sm:$0xff] %v1411
    %1438 = vst [vmem:[#allocation2 + $0x58] sm:$0xff] %v1413
    %1439 = vst [vmem:[#allocation2 + $0x60] sm:$0xff] %v1417
    %1440 = vst [vmem:[#allocation2 + $0x68] sm:$0xff] %v1419
    %1441 = vst [vmem:[#allocation2 + $0x70] sm:$0xff] %v1423
    %1442 = vst [vmem:[#allocation2 + $0x78] sm:$0xff] %v1425
    %v1443 = vld [vmem:[#allocation2] sm:$0xff]
    %v1444 = vld [vmem:[#allocation2 + $0x8] sm:$0xff]
    %v1445 = vld [vmem:[#allocation9] sm:$0xff]
    %v1446 = vld [vmem:[#allocation9 + $0x8] sm:$0xff]
    %v1447 = vld [vmem:[#allocation9 + $0x10] sm:$0xff]
    %v1448 = vld [vmem:[#allocation9 + $0x18] sm:$0xff]
    %v1449 = vld [vmem:[#allocation9 + $0x20] sm:$0xff]
    %v1450 = vld [vmem:[#allocation9 + $0x28] sm:$0xff]
    %v1451 = vld [vmem:[#allocation9 + $0x30] sm:$0xff]
    %v1452 = vld [vmem:[#allocation9 + $0x38] sm:$0xff]
    %v1453 = vld [vmem:[#allocation9 + $0x40] sm:$0xff]
    %v1454 = vld [vmem:[#allocation9 + $0x48] sm:$0xff]
    %v1455 = vld [vmem:[#allocation9 + $0x50] sm:$0xff]
    %v1456 = vld [vmem:[#allocation9 + $0x58] sm:$0xff]
    %v1457 = vld [vmem:[#allocation9 + $0x60] sm:$0xff]
    %v1458 = vld [vmem:[#allocation9 + $0x68] sm:$0xff]
    %v1459 = vld [vmem:[#allocation9 + $0x70] sm:$0xff]
    %v1460 = vld [vmem:[#allocation9 + $0x78] sm:$0xff]
    %1461 = vmatprep.subr.mxu0 0.0
    %1462 = vmatpush1.msra.mxu0 0.0
    %1463 = vmatprep.subr.mxu0 0.0
    %1464 = vmatpush1.msra.mxu0 0.0
    %1465 = vmatprep.subr.mxu0 0.0
    %1466 = vmatpush1.msra.mxu0 0.0
    %1467 = vmatprep.subr.mxu0 0.0
    %1468 = vmatpush1.msra.mxu0 0.0
    %1469 = vmatprep.subr.mxu0 0.0
    %1470 = vmatpush1.msra.mxu0 0.0
    %1471 = vmatprep.subr.mxu0 0.0
    %1472 = vmatpush1.msra.mxu0 0.0
    %1473 = vmatprep.subr.mxu0 0.0
    %1474 = vmatpush1.msra.mxu0 0.0
    %1475 = vmatprep.subr.mxu0 0.0
    %1476 = vmatpush1.msra.mxu0 0.0
    %1477 = vmatprep.subr.mxu0 %v1460
    %1478 = vmatpush1.msra.mxu0 %v1459
    %1479 = vmatprep.subr.mxu0 %v1458
    %1480 = vmatpush1.msra.mxu0 %v1457
    %1481 = vmatprep.subr.mxu0 %v1456
    %1482 = vmatpush1.msra.mxu0 %v1455
    %1483 = vmatprep.subr.mxu0 %v1454
    %1484 = vmatpush1.msra.mxu0 %v1453
    %1485 = vmatprep.subr.mxu0 %v1452
    %1486 = vmatpush1.msra.mxu0 %v1451
    %1487 = vmatprep.subr.mxu0 %v1450
    %1488 = vmatpush1.msra.mxu0 %v1449
    %1489 = vmatprep.subr.mxu0 %v1448
    %1490 = vmatpush1.msra.mxu0 %v1447
    %1491 = vmatprep.subr.mxu0 %v1446
    %1492 = vmatpush1.msra.mxu0 %v1445
    %1493 = vmatprep.subr.mxu0 0.0
    %1494 = vmatpush2.msra.mxu0 0.0
    %1495 = vmatprep.subr.mxu0 0.0
    %1496 = vmatpush2.msra.mxu0 0.0
    %1497 = vmatprep.subr.mxu0 0.0
    %1498 = vmatpush2.msra.mxu0 0.0
    %1499 = vmatprep.subr.mxu0 0.0
    %1500 = vmatpush2.msra.mxu0 0.0
    %1501 = vmatprep.subr.mxu0 0.0
    %1502 = vmatpush2.msra.mxu0 0.0
    %1503 = vmatprep.subr.mxu0 0.0
    %1504 = vmatpush2.msra.mxu0 0.0
    %1505 = vmatprep.subr.mxu0 0.0
    %1506 = vmatpush2.msra.mxu0 0.0
    %1507 = vmatprep.subr.mxu0 0.0
    %1508 = vmatpush2.msra.mxu0 0.0
    %1509 = vmatprep.subr.mxu0 0.0
    %1510 = vmatpush2.msra.mxu0 0.0
    %1511 = vmatprep.subr.mxu0 0.0
    %1512 = vmatpush2.msra.mxu0 0.0
    %1513 = vmatprep.subr.mxu0 0.0
    %1514 = vmatpush2.msra.mxu0 0.0
    %1515 = vmatprep.subr.mxu0 0.0
    %1516 = vmatpush2.msra.mxu0 0.0
    %1517 = vmatprep.subr.mxu0 0.0
    %1518 = vmatpush2.msra.mxu0 0.0
    %1519 = vmatprep.subr.mxu0 0.0
    %1520 = vmatpush2.msra.mxu0 0.0
    %1521 = vmatprep.subr.mxu0 0.0
    %1522 = vmatpush2.msra.mxu0 0.0
    %1523 = vmatprep.subr.mxu0 0.0
    %1524 = vmatpush2.msra.mxu0 0.0
    %1525 = vmatprep.mubr.f32.mxu0 0.0
    %1526 = vmatmul.mubr.f32.gmra.mxu0 %v273
    %v1527 = vpop.f32.mrf.mxu0
    %v1528 = vadd.f32 0.0, %v1527
    %v1529 = vpop.f32.mrf.mxu0
    %v1530 = vadd.f32 0.0, %v1529
    %1531 = vdwg.mxu0
    %v1532 = vadd.f32 %v1443, %v1528
    %v1533 = vadd.f32 %v1444, %v1530
    %v1534 = vxor.u32 %v1532, 2147483648
    %v1535 = vxor.u32 %v1533, 2147483648
    %v1536 = vmul.f32 %v1534, 1.442695
    %v1537 = vpow.pop %v1536
    %v1538 = vmul.f32 %v1535, 1.442695
    %v1539 = vpow.pop %v1538
    %v1540 = vadd.f32 %v1537, 1.0
    %v1541 = vadd.f32 %v1539, 1.0
    %v1542 = vrcp.pop %v1540
    %v1543 = vmul.f32 1.0, %v1542
    %v1544 = vrcp.pop %v1541
    %v1545 = vmul.f32 1.0, %v1544
    %v1546 = vtanh.pop %v1533
    %v1547 = vmul.f32 %v1543, 0.0
    %1549 = vrot.lane.b32.xlu0 %v1546, 64
    %v1550 = vpop.permute.xlu0 %1549
    %v1552 = vmul.f32 %v1543, %v1550
    %1554 = vrot.lane.b32.xlu0 %v1552, 64
    %v1555 = vpop.permute.xlu0 %1554
    %v1557 = vadd.f32 %v1547, %v1555
    %v1558 = vtanh.pop %v1557
    %1560 = vrot.lane.b32.xlu0 %v1558, 64
    %v1561 = vpop.permute.xlu0 %1560
    %v1563 = vmul.f32 %v1545, %v1561
    %v1564 = vld [vmem:[#allocation2 + $0x10] sm:$0xff]
    %v1565 = vld [vmem:[#allocation2 + $0x18] sm:$0xff]
    %v1567 = vsel %vm271, %v1563, 0
    %1569 = vmatprep.subr.mxu0 0.0
    %1570 = vmatpush1.msra.mxu0 0.0
    %1571 = vmatprep.subr.mxu0 0.0
    %1572 = vmatpush1.msra.mxu0 0.0
    %1573 = vmatprep.subr.mxu0 0.0
    %1574 = vmatpush1.msra.mxu0 0.0
    %1575 = vmatprep.subr.mxu0 0.0
    %1576 = vmatpush1.msra.mxu0 0.0
    %1577 = vmatprep.subr.mxu0 0.0
    %1578 = vmatpush1.msra.mxu0 0.0
    %1579 = vmatprep.subr.mxu0 0.0
    %1580 = vmatpush1.msra.mxu0 0.0
    %1581 = vmatprep.subr.mxu0 0.0
    %1582 = vmatpush1.msra.mxu0 0.0
    %1583 = vmatprep.subr.mxu0 0.0
    %1584 = vmatpush1.msra.mxu0 0.0
    %1585 = vmatprep.subr.mxu0 %v1460
    %1586 = vmatpush1.msra.mxu0 %v1459
    %1587 = vmatprep.subr.mxu0 %v1458
    %1588 = vmatpush1.msra.mxu0 %v1457
    %1589 = vmatprep.subr.mxu0 %v1456
    %1590 = vmatpush1.msra.mxu0 %v1455
    %1591 = vmatprep.subr.mxu0 %v1454
    %1592 = vmatpush1.msra.mxu0 %v1453
    %1593 = vmatprep.subr.mxu0 %v1452
    %1594 = vmatpush1.msra.mxu0 %v1451
    %1595 = vmatprep.subr.mxu0 %v1450
    %1596 = vmatpush1.msra.mxu0 %v1449
    %1597 = vmatprep.subr.mxu0 %v1448
    %1598 = vmatpush1.msra.mxu0 %v1447
    %1599 = vmatprep.subr.mxu0 %v1446
    %1600 = vmatpush1.msra.mxu0 %v1445
    %1601 = vmatprep.subr.mxu0 0.0
    %1602 = vmatpush2.msra.mxu0 0.0
    %1603 = vmatprep.subr.mxu0 0.0
    %1604 = vmatpush2.msra.mxu0 0.0
    %1605 = vmatprep.subr.mxu0 0.0
    %1606 = vmatpush2.msra.mxu0 0.0
    %1607 = vmatprep.subr.mxu0 0.0
    %1608 = vmatpush2.msra.mxu0 0.0
    %1609 = vmatprep.subr.mxu0 0.0
    %1610 = vmatpush2.msra.mxu0 0.0
    %1611 = vmatprep.subr.mxu0 0.0
    %1612 = vmatpush2.msra.mxu0 0.0
    %1613 = vmatprep.subr.mxu0 0.0
    %1614 = vmatpush2.msra.mxu0 0.0
    %1615 = vmatprep.subr.mxu0 0.0
    %1616 = vmatpush2.msra.mxu0 0.0
    %1617 = vmatprep.subr.mxu0 0.0
    %1618 = vmatpush2.msra.mxu0 0.0
    %1619 = vmatprep.subr.mxu0 0.0
    %1620 = vmatpush2.msra.mxu0 0.0
    %1621 = vmatprep.subr.mxu0 0.0
    %1622 = vmatpush2.msra.mxu0 0.0
    %1623 = vmatprep.subr.mxu0 0.0
    %1624 = vmatpush2.msra.mxu0 0.0
    %1625 = vmatprep.subr.mxu0 0.0
    %1626 = vmatpush2.msra.mxu0 0.0
    %1627 = vmatprep.subr.mxu0 0.0
    %1628 = vmatpush2.msra.mxu0 0.0
    %1629 = vmatprep.subr.mxu0 0.0
    %1630 = vmatpush2.msra.mxu0 0.0
    %1631 = vmatprep.subr.mxu0 0.0
    %1632 = vmatpush2.msra.mxu0 0.0
    %1633 = vmatprep.mubr.f32.mxu0 0.0
    %1634 = vmatmul.mubr.f32.gmra.mxu0 %v1567
    %v1635 = vpop.f32.mrf.mxu0
    %v1636 = vadd.f32 0.0, %v1635
    %v1637 = vpop.f32.mrf.mxu0
    %v1638 = vadd.f32 0.0, %v1637
    %1639 = vdwg.mxu0
    %v1640 = vadd.f32 %v1564, %v1636
    %v1641 = vadd.f32 %v1565, %v1638
    %v1642 = vxor.u32 %v1640, 2147483648
    %v1643 = vxor.u32 %v1641, 2147483648
    %v1644 = vmul.f32 %v1642, 1.442695
    %v1645 = vpow.pop %v1644
    %v1646 = vmul.f32 %v1643, 1.442695
    %v1647 = vpow.pop %v1646
    %v1648 = vadd.f32 %v1645, 1.0
    %v1649 = vadd.f32 %v1647, 1.0
    %v1650 = vrcp.pop %v1648
    %v1651 = vmul.f32 1.0, %v1650
    %v1652 = vrcp.pop %v1649
    %v1653 = vmul.f32 1.0, %v1652
    %v1654 = vtanh.pop %v1641
    %v1655 = vmul.f32 %v1651, %v1557
    %1657 = vrot.lane.b32.xlu0 %v1654, 64
    %v1658 = vpop.permute.xlu0 %1657
    %v1660 = vmul.f32 %v1651, %v1658
    %1662 = vrot.lane.b32.xlu0 %v1660, 64
    %v1663 = vpop.permute.xlu0 %1662
    %v1665 = vadd.f32 %v1655, %v1663
    %v1666 = vtanh.pop %v1665
    %1668 = vrot.lane.b32.xlu0 %v1666, 64
    %v1669 = vpop.permute.xlu0 %1668
    %v1671 = vmul.f32 %v1653, %v1669
    %v1672 = vld [vmem:[#allocation2 + $0x20] sm:$0xff]
    %v1673 = vld [vmem:[#allocation2 + $0x28] sm:$0xff]
    %v1675 = vsel %vm271, %v1671, 0
    %1677 = vmatprep.subr.mxu0 0.0
    %1678 = vmatpush1.msra.mxu0 0.0
    %1679 = vmatprep.subr.mxu0 0.0
    %1680 = vmatpush1.msra.mxu0 0.0
    %1681 = vmatprep.subr.mxu0 0.0
    %1682 = vmatpush1.msra.mxu0 0.0
    %1683 = vmatprep.subr.mxu0 0.0
    %1684 = vmatpush1.msra.mxu0 0.0
    %1685 = vmatprep.subr.mxu0 0.0
    %1686 = vmatpush1.msra.mxu0 0.0
    %1687 = vmatprep.subr.mxu0 0.0
    %1688 = vmatpush1.msra.mxu0 0.0
    %1689 = vmatprep.subr.mxu0 0.0
    %1690 = vmatpush1.msra.mxu0 0.0
    %1691 = vmatprep.subr.mxu0 0.0
    %1692 = vmatpush1.msra.mxu0 0.0
    %1693 = vmatprep.subr.mxu0 %v1460
    %1694 = vmatpush1.msra.mxu0 %v1459
    %1695 = vmatprep.subr.mxu0 %v1458
    %1696 = vmatpush1.msra.mxu0 %v1457
    %1697 = vmatprep.subr.mxu0 %v1456
    %1698 = vmatpush1.msra.mxu0 %v1455
    %1699 = vmatprep.subr.mxu0 %v1454
    %1700 = vmatpush1.msra.mxu0 %v1453
    %1701 = vmatprep.subr.mxu0 %v1452
    %1702 = vmatpush1.msra.mxu0 %v1451
    %1703 = vmatprep.subr.mxu0 %v1450
    %1704 = vmatpush1.msra.mxu0 %v1449
    %1705 = vmatprep.subr.mxu0 %v1448
    %1706 = vmatpush1.msra.mxu0 %v1447
    %1707 = vmatprep.subr.mxu0 %v1446
    %1708 = vmatpush1.msra.mxu0 %v1445
    %1709 = vmatprep.subr.mxu0 0.0
    %1710 = vmatpush2.msra.mxu0 0.0
    %1711 = vmatprep.subr.mxu0 0.0
    %1712 = vmatpush2.msra.mxu0 0.0
    %1713 = vmatprep.subr.mxu0 0.0
    %1714 = vmatpush2.msra.mxu0 0.0
    %1715 = vmatprep.subr.mxu0 0.0
    %1716 = vmatpush2.msra.mxu0 0.0
    %1717 = vmatprep.subr.mxu0 0.0
    %1718 = vmatpush2.msra.mxu0 0.0
    %1719 = vmatprep.subr.mxu0 0.0
    %1720 = vmatpush2.msra.mxu0 0.0
    %1721 = vmatprep.subr.mxu0 0.0
    %1722 = vmatpush2.msra.mxu0 0.0
    %1723 = vmatprep.subr.mxu0 0.0
    %1724 = vmatpush2.msra.mxu0 0.0
    %1725 = vmatprep.subr.mxu0 0.0
    %1726 = vmatpush2.msra.mxu0 0.0
    %1727 = vmatprep.subr.mxu0 0.0
    %1728 = vmatpush2.msra.mxu0 0.0
    %1729 = vmatprep.subr.mxu0 0.0
    %1730 = vmatpush2.msra.mxu0 0.0
    %1731 = vmatprep.subr.mxu0 0.0
    %1732 = vmatpush2.msra.mxu0 0.0
    %1733 = vmatprep.subr.mxu0 0.0
    %1734 = vmatpush2.msra.mxu0 0.0
    %1735 = vmatprep.subr.mxu0 0.0
    %1736 = vmatpush2.msra.mxu0 0.0
    %1737 = vmatprep.subr.mxu0 0.0
    %1738 = vmatpush2.msra.mxu0 0.0
    %1739 = vmatprep.subr.mxu0 0.0
    %1740 = vmatpush2.msra.mxu0 0.0
    %1741 = vmatprep.mubr.f32.mxu0 0.0
    %1742 = vmatmul.mubr.f32.gmra.mxu0 %v1675
    %v1743 = vpop.f32.mrf.mxu0
    %v1744 = vadd.f32 0.0, %v1743
    %v1745 = vpop.f32.mrf.mxu0
    %v1746 = vadd.f32 0.0, %v1745
    %1747 = vdwg.mxu0
    %v1748 = vadd.f32 %v1672, %v1744
    %v1749 = vadd.f32 %v1673, %v1746
    %v1750 = vxor.u32 %v1748, 2147483648
    %v1751 = vxor.u32 %v1749, 2147483648
    %v1752 = vmul.f32 %v1750, 1.442695
    %v1753 = vpow.pop %v1752
    %v1754 = vmul.f32 %v1751, 1.442695
    %v1755 = vpow.pop %v1754
    %v1756 = vadd.f32 %v1753, 1.0
    %v1757 = vadd.f32 %v1755, 1.0
    %v1758 = vrcp.pop %v1756
    %v1759 = vmul.f32 1.0, %v1758
    %v1760 = vrcp.pop %v1757
    %v1761 = vmul.f32 1.0, %v1760
    %v1762 = vtanh.pop %v1749
    %v1763 = vmul.f32 %v1759, %v1665
    %1765 = vrot.lane.b32.xlu0 %v1762, 64
    %v1766 = vpop.permute.xlu0 %1765
    %v1768 = vmul.f32 %v1759, %v1766
    %1770 = vrot.lane.b32.xlu0 %v1768, 64
    %v1771 = vpop.permute.xlu0 %1770
    %v1773 = vadd.f32 %v1763, %v1771
    %v1774 = vtanh.pop %v1773
    %1776 = vrot.lane.b32.xlu0 %v1774, 64
    %v1777 = vpop.permute.xlu0 %1776
    %v1779 = vmul.f32 %v1761, %v1777
    %v1780 = vld [vmem:[#allocation2 + $0x30] sm:$0xff]
    %v1781 = vld [vmem:[#allocation2 + $0x38] sm:$0xff]
    %v1783 = vsel %vm271, %v1779, 0
    %1785 = vmatprep.subr.mxu0 0.0
    %1786 = vmatpush1.msra.mxu0 0.0
    %1787 = vmatprep.subr.mxu0 0.0
    %1788 = vmatpush1.msra.mxu0 0.0
    %1789 = vmatprep.subr.mxu0 0.0
    %1790 = vmatpush1.msra.mxu0 0.0
    %1791 = vmatprep.subr.mxu0 0.0
    %1792 = vmatpush1.msra.mxu0 0.0
    %1793 = vmatprep.subr.mxu0 0.0
    %1794 = vmatpush1.msra.mxu0 0.0
    %1795 = vmatprep.subr.mxu0 0.0
    %1796 = vmatpush1.msra.mxu0 0.0
    %1797 = vmatprep.subr.mxu0 0.0
    %1798 = vmatpush1.msra.mxu0 0.0
    %1799 = vmatprep.subr.mxu0 0.0
    %1800 = vmatpush1.msra.mxu0 0.0
    %1801 = vmatprep.subr.mxu0 %v1460
    %1802 = vmatpush1.msra.mxu0 %v1459
    %1803 = vmatprep.subr.mxu0 %v1458
    %1804 = vmatpush1.msra.mxu0 %v1457
    %1805 = vmatprep.subr.mxu0 %v1456
    %1806 = vmatpush1.msra.mxu0 %v1455
    %1807 = vmatprep.subr.mxu0 %v1454
    %1808 = vmatpush1.msra.mxu0 %v1453
    %1809 = vmatprep.subr.mxu0 %v1452
    %1810 = vmatpush1.msra.mxu0 %v1451
    %1811 = vmatprep.subr.mxu0 %v1450
    %1812 = vmatpush1.msra.mxu0 %v1449
    %1813 = vmatprep.subr.mxu0 %v1448
    %1814 = vmatpush1.msra.mxu0 %v1447
    %1815 = vmatprep.subr.mxu0 %v1446
    %1816 = vmatpush1.msra.mxu0 %v1445
    %1817 = vmatprep.subr.mxu0 0.0
    %1818 = vmatpush2.msra.mxu0 0.0
    %1819 = vmatprep.subr.mxu0 0.0
    %1820 = vmatpush2.msra.mxu0 0.0
    %1821 = vmatprep.subr.mxu0 0.0
    %1822 = vmatpush2.msra.mxu0 0.0
    %1823 = vmatprep.subr.mxu0 0.0
    %1824 = vmatpush2.msra.mxu0 0.0
    %1825 = vmatprep.subr.mxu0 0.0
    %1826 = vmatpush2.msra.mxu0 0.0
    %1827 = vmatprep.subr.mxu0 0.0
    %1828 = vmatpush2.msra.mxu0 0.0
    %1829 = vmatprep.subr.mxu0 0.0
    %1830 = vmatpush2.msra.mxu0 0.0
    %1831 = vmatprep.subr.mxu0 0.0
    %1832 = vmatpush2.msra.mxu0 0.0
    %1833 = vmatprep.subr.mxu0 0.0
    %1834 = vmatpush2.msra.mxu0 0.0
    %1835 = vmatprep.subr.mxu0 0.0
    %1836 = vmatpush2.msra.mxu0 0.0
    %1837 = vmatprep.subr.mxu0 0.0
    %1838 = vmatpush2.msra.mxu0 0.0
    %1839 = vmatprep.subr.mxu0 0.0
    %1840 = vmatpush2.msra.mxu0 0.0
    %1841 = vmatprep.subr.mxu0 0.0
    %1842 = vmatpush2.msra.mxu0 0.0
    %1843 = vmatprep.subr.mxu0 0.0
    %1844 = vmatpush2.msra.mxu0 0.0
    %1845 = vmatprep.subr.mxu0 0.0
    %1846 = vmatpush2.msra.mxu0 0.0
    %1847 = vmatprep.subr.mxu0 0.0
    %1848 = vmatpush2.msra.mxu0 0.0
    %1849 = vmatprep.mubr.f32.mxu0 0.0
    %1850 = vmatmul.mubr.f32.gmra.mxu0 %v1783
    %v1851 = vpop.f32.mrf.mxu0
    %v1852 = vadd.f32 0.0, %v1851
    %v1853 = vpop.f32.mrf.mxu0
    %v1854 = vadd.f32 0.0, %v1853
    %1855 = vdwg.mxu0
    %v1856 = vadd.f32 %v1780, %v1852
    %v1857 = vadd.f32 %v1781, %v1854
    %v1858 = vxor.u32 %v1856, 2147483648
    %v1859 = vxor.u32 %v1857, 2147483648
    %v1860 = vmul.f32 %v1858, 1.442695
    %v1861 = vpow.pop %v1860
    %v1862 = vmul.f32 %v1859, 1.442695
    %v1863 = vpow.pop %v1862
    %v1864 = vadd.f32 %v1861, 1.0
    %v1865 = vadd.f32 %v1863, 1.0
    %v1866 = vrcp.pop %v1864
    %v1867 = vmul.f32 1.0, %v1866
    %v1868 = vrcp.pop %v1865
    %v1869 = vmul.f32 1.0, %v1868
    %v1870 = vtanh.pop %v1857
    %v1871 = vmul.f32 %v1867, %v1773
    %1873 = vrot.lane.b32.xlu0 %v1870, 64
    %v1874 = vpop.permute.xlu0 %1873
    %v1876 = vmul.f32 %v1867, %v1874
    %1878 = vrot.lane.b32.xlu0 %v1876, 64
    %v1879 = vpop.permute.xlu0 %1878
    %v1881 = vadd.f32 %v1871, %v1879
    %v1882 = vtanh.pop %v1881
    %1884 = vrot.lane.b32.xlu0 %v1882, 64
    %v1885 = vpop.permute.xlu0 %1884
    %v1887 = vmul.f32 %v1869, %v1885
    %v1888 = vld [vmem:[#allocation2 + $0x40] sm:$0xff]
    %v1889 = vld [vmem:[#allocation2 + $0x48] sm:$0xff]
    %v1891 = vsel %vm271, %v1887, 0
    %1893 = vmatprep.subr.mxu0 0.0
    %1894 = vmatpush1.msra.mxu0 0.0
    %1895 = vmatprep.subr.mxu0 0.0
    %1896 = vmatpush1.msra.mxu0 0.0
    %1897 = vmatprep.subr.mxu0 0.0
    %1898 = vmatpush1.msra.mxu0 0.0
    %1899 = vmatprep.subr.mxu0 0.0
    %1900 = vmatpush1.msra.mxu0 0.0
    %1901 = vmatprep.subr.mxu0 0.0
    %1902 = vmatpush1.msra.mxu0 0.0
    %1903 = vmatprep.subr.mxu0 0.0
    %1904 = vmatpush1.msra.mxu0 0.0
    %1905 = vmatprep.subr.mxu0 0.0
    %1906 = vmatpush1.msra.mxu0 0.0
    %1907 = vmatprep.subr.mxu0 0.0
    %1908 = vmatpush1.msra.mxu0 0.0
    %1909 = vmatprep.subr.mxu0 %v1460
    %1910 = vmatpush1.msra.mxu0 %v1459
    %1911 = vmatprep.subr.mxu0 %v1458
    %1912 = vmatpush1.msra.mxu0 %v1457
    %1913 = vmatprep.subr.mxu0 %v1456
    %1914 = vmatpush1.msra.mxu0 %v1455
    %1915 = vmatprep.subr.mxu0 %v1454
    %1916 = vmatpush1.msra.mxu0 %v1453
    %1917 = vmatprep.subr.mxu0 %v1452
    %1918 = vmatpush1.msra.mxu0 %v1451
    %1919 = vmatprep.subr.mxu0 %v1450
    %1920 = vmatpush1.msra.mxu0 %v1449
    %1921 = vmatprep.subr.mxu0 %v1448
    %1922 = vmatpush1.msra.mxu0 %v1447
    %1923 = vmatprep.subr.mxu0 %v1446
    %1924 = vmatpush1.msra.mxu0 %v1445
    %1925 = vmatprep.subr.mxu0 0.0
    %1926 = vmatpush2.msra.mxu0 0.0
    %1927 = vmatprep.subr.mxu0 0.0
    %1928 = vmatpush2.msra.mxu0 0.0
    %1929 = vmatprep.subr.mxu0 0.0
    %1930 = vmatpush2.msra.mxu0 0.0
    %1931 = vmatprep.subr.mxu0 0.0
    %1932 = vmatpush2.msra.mxu0 0.0
    %1933 = vmatprep.subr.mxu0 0.0
    %1934 = vmatpush2.msra.mxu0 0.0
    %1935 = vmatprep.subr.mxu0 0.0
    %1936 = vmatpush2.msra.mxu0 0.0
    %1937 = vmatprep.subr.mxu0 0.0
    %1938 = vmatpush2.msra.mxu0 0.0
    %1939 = vmatprep.subr.mxu0 0.0
    %1940 = vmatpush2.msra.mxu0 0.0
    %1941 = vmatprep.subr.mxu0 0.0
    %1942 = vmatpush2.msra.mxu0 0.0
    %1943 = vmatprep.subr.mxu0 0.0
    %1944 = vmatpush2.msra.mxu0 0.0
    %1945 = vmatprep.subr.mxu0 0.0
    %1946 = vmatpush2.msra.mxu0 0.0
    %1947 = vmatprep.subr.mxu0 0.0
    %1948 = vmatpush2.msra.mxu0 0.0
    %1949 = vmatprep.subr.mxu0 0.0
    %1950 = vmatpush2.msra.mxu0 0.0
    %1951 = vmatprep.subr.mxu0 0.0
    %1952 = vmatpush2.msra.mxu0 0.0
    %1953 = vmatprep.subr.mxu0 0.0
    %1954 = vmatpush2.msra.mxu0 0.0
    %1955 = vmatprep.subr.mxu0 0.0
    %1956 = vmatpush2.msra.mxu0 0.0
    %1957 = vmatprep.mubr.f32.mxu0 0.0
    %1958 = vmatmul.mubr.f32.gmra.mxu0 %v1891
    %v1959 = vpop.f32.mrf.mxu0
    %v1960 = vadd.f32 0.0, %v1959
    %v1961 = vpop.f32.mrf.mxu0
    %v1962 = vadd.f32 0.0, %v1961
    %1963 = vdwg.mxu0
    %v1964 = vadd.f32 %v1888, %v1960
    %v1965 = vadd.f32 %v1889, %v1962
    %v1966 = vxor.u32 %v1964, 2147483648
    %v1967 = vxor.u32 %v1965, 2147483648
    %v1968 = vmul.f32 %v1966, 1.442695
    %v1969 = vpow.pop %v1968
    %v1970 = vmul.f32 %v1967, 1.442695
    %v1971 = vpow.pop %v1970
    %v1972 = vadd.f32 %v1969, 1.0
    %v1973 = vadd.f32 %v1971, 1.0
    %v1974 = vrcp.pop %v1972
    %v1975 = vmul.f32 1.0, %v1974
    %v1976 = vrcp.pop %v1973
    %v1977 = vmul.f32 1.0, %v1976
    %v1978 = vtanh.pop %v1965
    %v1979 = vmul.f32 %v1975, %v1881
    %1981 = vrot.lane.b32.xlu0 %v1978, 64
    %v1982 = vpop.permute.xlu0 %1981
    %v1984 = vmul.f32 %v1975, %v1982
    %1986 = vrot.lane.b32.xlu0 %v1984, 64
    %v1987 = vpop.permute.xlu0 %1986
    %v1989 = vadd.f32 %v1979, %v1987
    %v1990 = vtanh.pop %v1989
    %1992 = vrot.lane.b32.xlu0 %v1990, 64
    %v1993 = vpop.permute.xlu0 %1992
    %v1995 = vmul.f32 %v1977, %v1993
    %v1996 = vld [vmem:[#allocation2 + $0x50] sm:$0xff]
    %v1997 = vld [vmem:[#allocation2 + $0x58] sm:$0xff]
    %v1999 = vsel %vm271, %v1995, 0
    %2001 = vmatprep.subr.mxu0 0.0
    %2002 = vmatpush1.msra.mxu0 0.0
    %2003 = vmatprep.subr.mxu0 0.0
    %2004 = vmatpush1.msra.mxu0 0.0
    %2005 = vmatprep.subr.mxu0 0.0
    %2006 = vmatpush1.msra.mxu0 0.0
    %2007 = vmatprep.subr.mxu0 0.0
    %2008 = vmatpush1.msra.mxu0 0.0
    %2009 = vmatprep.subr.mxu0 0.0
    %2010 = vmatpush1.msra.mxu0 0.0
    %2011 = vmatprep.subr.mxu0 0.0
    %2012 = vmatpush1.msra.mxu0 0.0
    %2013 = vmatprep.subr.mxu0 0.0
    %2014 = vmatpush1.msra.mxu0 0.0
    %2015 = vmatprep.subr.mxu0 0.0
    %2016 = vmatpush1.msra.mxu0 0.0
    %2017 = vmatprep.subr.mxu0 %v1460
    %2018 = vmatpush1.msra.mxu0 %v1459
    %2019 = vmatprep.subr.mxu0 %v1458
    %2020 = vmatpush1.msra.mxu0 %v1457
    %2021 = vmatprep.subr.mxu0 %v1456
    %2022 = vmatpush1.msra.mxu0 %v1455
    %2023 = vmatprep.subr.mxu0 %v1454
    %2024 = vmatpush1.msra.mxu0 %v1453
    %2025 = vmatprep.subr.mxu0 %v1452
    %2026 = vmatpush1.msra.mxu0 %v1451
    %2027 = vmatprep.subr.mxu0 %v1450
    %2028 = vmatpush1.msra.mxu0 %v1449
    %2029 = vmatprep.subr.mxu0 %v1448
    %2030 = vmatpush1.msra.mxu0 %v1447
    %2031 = vmatprep.subr.mxu0 %v1446
    %2032 = vmatpush1.msra.mxu0 %v1445
    %2033 = vmatprep.subr.mxu0 0.0
    %2034 = vmatpush2.msra.mxu0 0.0
    %2035 = vmatprep.subr.mxu0 0.0
    %2036 = vmatpush2.msra.mxu0 0.0
    %2037 = vmatprep.subr.mxu0 0.0
    %2038 = vmatpush2.msra.mxu0 0.0
    %2039 = vmatprep.subr.mxu0 0.0
    %2040 = vmatpush2.msra.mxu0 0.0
    %2041 = vmatprep.subr.mxu0 0.0
    %2042 = vmatpush2.msra.mxu0 0.0
    %2043 = vmatprep.subr.mxu0 0.0
    %2044 = vmatpush2.msra.mxu0 0.0
    %2045 = vmatprep.subr.mxu0 0.0
    %2046 = vmatpush2.msra.mxu0 0.0
    %2047 = vmatprep.subr.mxu0 0.0
    %2048 = vmatpush2.msra.mxu0 0.0
    %2049 = vmatprep.subr.mxu0 0.0
    %2050 = vmatpush2.msra.mxu0 0.0
    %2051 = vmatprep.subr.mxu0 0.0
    %2052 = vmatpush2.msra.mxu0 0.0
    %2053 = vmatprep.subr.mxu0 0.0
    %2054 = vmatpush2.msra.mxu0 0.0
    %2055 = vmatprep.subr.mxu0 0.0
    %2056 = vmatpush2.msra.mxu0 0.0
    %2057 = vmatprep.subr.mxu0 0.0
    %2058 = vmatpush2.msra.mxu0 0.0
    %2059 = vmatprep.subr.mxu0 0.0
    %2060 = vmatpush2.msra.mxu0 0.0
    %2061 = vmatprep.subr.mxu0 0.0
    %2062 = vmatpush2.msra.mxu0 0.0
    %2063 = vmatprep.subr.mxu0 0.0
    %2064 = vmatpush2.msra.mxu0 0.0
    %2065 = vmatprep.mubr.f32.mxu0 0.0
    %2066 = vmatmul.mubr.f32.gmra.mxu0 %v1999
    %v2067 = vpop.f32.mrf.mxu0
    %v2068 = vadd.f32 0.0, %v2067
    %v2069 = vpop.f32.mrf.mxu0
    %v2070 = vadd.f32 0.0, %v2069
    %2071 = vdwg.mxu0
    %v2072 = vadd.f32 %v1996, %v2068
    %v2073 = vadd.f32 %v1997, %v2070
    %v2074 = vxor.u32 %v2072, 2147483648
    %v2075 = vxor.u32 %v2073, 2147483648
    %v2076 = vmul.f32 %v2074, 1.442695
    %v2077 = vpow.pop %v2076
    %v2078 = vmul.f32 %v2075, 1.442695
    %v2079 = vpow.pop %v2078
    %v2080 = vadd.f32 %v2077, 1.0
    %v2081 = vadd.f32 %v2079, 1.0
    %v2082 = vrcp.pop %v2080
    %v2083 = vmul.f32 1.0, %v2082
    %v2084 = vrcp.pop %v2081
    %v2085 = vmul.f32 1.0, %v2084
    %v2086 = vtanh.pop %v2073
    %v2087 = vmul.f32 %v2083, %v1989
    %2089 = vrot.lane.b32.xlu0 %v2086, 64
    %v2090 = vpop.permute.xlu0 %2089
    %v2092 = vmul.f32 %v2083, %v2090
    %2094 = vrot.lane.b32.xlu0 %v2092, 64
    %v2095 = vpop.permute.xlu0 %2094
    %v2097 = vadd.f32 %v2087, %v2095
    %v2098 = vtanh.pop %v2097
    %2100 = vrot.lane.b32.xlu0 %v2098, 64
    %v2101 = vpop.permute.xlu0 %2100
    %v2103 = vmul.f32 %v2085, %v2101
    %v2104 = vld [vmem:[#allocation2 + $0x60] sm:$0xff]
    %v2105 = vld [vmem:[#allocation2 + $0x68] sm:$0xff]
    %v2107 = vsel %vm271, %v2103, 0
    %2109 = vmatprep.subr.mxu0 0.0
    %2110 = vmatpush1.msra.mxu0 0.0
    %2111 = vmatprep.subr.mxu0 0.0
    %2112 = vmatpush1.msra.mxu0 0.0
    %2113 = vmatprep.subr.mxu0 0.0
    %2114 = vmatpush1.msra.mxu0 0.0
    %2115 = vmatprep.subr.mxu0 0.0
    %2116 = vmatpush1.msra.mxu0 0.0
    %2117 = vmatprep.subr.mxu0 0.0
    %2118 = vmatpush1.msra.mxu0 0.0
    %2119 = vmatprep.subr.mxu0 0.0
    %2120 = vmatpush1.msra.mxu0 0.0
    %2121 = vmatprep.subr.mxu0 0.0
    %2122 = vmatpush1.msra.mxu0 0.0
    %2123 = vmatprep.subr.mxu0 0.0
    %2124 = vmatpush1.msra.mxu0 0.0
    %2125 = vmatprep.subr.mxu0 %v1460
    %2126 = vmatpush1.msra.mxu0 %v1459
    %2127 = vmatprep.subr.mxu0 %v1458
    %2128 = vmatpush1.msra.mxu0 %v1457
    %2129 = vmatprep.subr.mxu0 %v1456
    %2130 = vmatpush1.msra.mxu0 %v1455
    %2131 = vmatprep.subr.mxu0 %v1454
    %2132 = vmatpush1.msra.mxu0 %v1453
    %2133 = vmatprep.subr.mxu0 %v1452
    %2134 = vmatpush1.msra.mxu0 %v1451
    %2135 = vmatprep.subr.mxu0 %v1450
    %2136 = vmatpush1.msra.mxu0 %v1449
    %2137 = vmatprep.subr.mxu0 %v1448
    %2138 = vmatpush1.msra.mxu0 %v1447
    %2139 = vmatprep.subr.mxu0 %v1446
    %2140 = vmatpush1.msra.mxu0 %v1445
    %2141 = vmatprep.subr.mxu0 0.0
    %2142 = vmatpush2.msra.mxu0 0.0
    %2143 = vmatprep.subr.mxu0 0.0
    %2144 = vmatpush2.msra.mxu0 0.0
    %2145 = vmatprep.subr.mxu0 0.0
    %2146 = vmatpush2.msra.mxu0 0.0
    %2147 = vmatprep.subr.mxu0 0.0
    %2148 = vmatpush2.msra.mxu0 0.0
    %2149 = vmatprep.subr.mxu0 0.0
    %2150 = vmatpush2.msra.mxu0 0.0
    %2151 = vmatprep.subr.mxu0 0.0
    %2152 = vmatpush2.msra.mxu0 0.0
    %2153 = vmatprep.subr.mxu0 0.0
    %2154 = vmatpush2.msra.mxu0 0.0
    %2155 = vmatprep.subr.mxu0 0.0
    %2156 = vmatpush2.msra.mxu0 0.0
    %2157 = vmatprep.subr.mxu0 0.0
    %2158 = vmatpush2.msra.mxu0 0.0
    %2159 = vmatprep.subr.mxu0 0.0
    %2160 = vmatpush2.msra.mxu0 0.0
    %2161 = vmatprep.subr.mxu0 0.0
    %2162 = vmatpush2.msra.mxu0 0.0
    %2163 = vmatprep.subr.mxu0 0.0
    %2164 = vmatpush2.msra.mxu0 0.0
    %2165 = vmatprep.subr.mxu0 0.0
    %2166 = vmatpush2.msra.mxu0 0.0
    %2167 = vmatprep.subr.mxu0 0.0
    %2168 = vmatpush2.msra.mxu0 0.0
    %2169 = vmatprep.subr.mxu0 0.0
    %2170 = vmatpush2.msra.mxu0 0.0
    %2171 = vmatprep.subr.mxu0 0.0
    %2172 = vmatpush2.msra.mxu0 0.0
    %2173 = vmatprep.mubr.f32.mxu0 0.0
    %2174 = vmatmul.mubr.f32.gmra.mxu0 %v2107
    %v2175 = vpop.f32.mrf.mxu0
    %v2176 = vadd.f32 0.0, %v2175
    %v2177 = vpop.f32.mrf.mxu0
    %v2178 = vadd.f32 0.0, %v2177
    %2179 = vdwg.mxu0
    %v2180 = vadd.f32 %v2104, %v2176
    %v2181 = vadd.f32 %v2105, %v2178
    %v2182 = vxor.u32 %v2180, 2147483648
    %v2183 = vxor.u32 %v2181, 2147483648
    %v2184 = vmul.f32 %v2182, 1.442695
    %v2185 = vpow.pop %v2184
    %v2186 = vmul.f32 %v2183, 1.442695
    %v2187 = vpow.pop %v2186
    %v2188 = vadd.f32 %v2185, 1.0
    %v2189 = vadd.f32 %v2187, 1.0
    %v2190 = vrcp.pop %v2188
    %v2191 = vmul.f32 1.0, %v2190
    %v2192 = vrcp.pop %v2189
    %v2193 = vmul.f32 1.0, %v2192
    %v2194 = vtanh.pop %v2181
    %v2195 = vmul.f32 %v2191, %v2097
    %2197 = vrot.lane.b32.xlu0 %v2194, 64
    %v2198 = vpop.permute.xlu0 %2197
    %v2200 = vmul.f32 %v2191, %v2198
    %2202 = vrot.lane.b32.xlu0 %v2200, 64
    %v2203 = vpop.permute.xlu0 %2202
    %v2205 = vadd.f32 %v2195, %v2203
    %v2206 = vtanh.pop %v2205
    %2208 = vrot.lane.b32.xlu0 %v2206, 64
    %v2209 = vpop.permute.xlu0 %2208
    %v2211 = vmul.f32 %v2193, %v2209
    %v2212 = vld [vmem:[#allocation2 + $0x70] sm:$0xff]
    %v2213 = vld [vmem:[#allocation2 + $0x78] sm:$0xff]
    %v2215 = vsel %vm271, %v2211, 0
    %2217 = vmatprep.subr.mxu0 0.0
    %2218 = vmatpush1.msra.mxu0 0.0
    %2219 = vmatprep.subr.mxu0 0.0
    %2220 = vmatpush1.msra.mxu0 0.0
    %2221 = vmatprep.subr.mxu0 0.0
    %2222 = vmatpush1.msra.mxu0 0.0
    %2223 = vmatprep.subr.mxu0 0.0
    %2224 = vmatpush1.msra.mxu0 0.0
    %2225 = vmatprep.subr.mxu0 0.0
    %2226 = vmatpush1.msra.mxu0 0.0
    %2227 = vmatprep.subr.mxu0 0.0
    %2228 = vmatpush1.msra.mxu0 0.0
    %2229 = vmatprep.subr.mxu0 0.0
    %2230 = vmatpush1.msra.mxu0 0.0
    %2231 = vmatprep.subr.mxu0 0.0
    %2232 = vmatpush1.msra.mxu0 0.0
    %2233 = vmatprep.subr.mxu0 %v1460
    %2234 = vmatpush1.msra.mxu0 %v1459
    %2235 = vmatprep.subr.mxu0 %v1458
    %2236 = vmatpush1.msra.mxu0 %v1457
    %2237 = vmatprep.subr.mxu0 %v1456
    %2238 = vmatpush1.msra.mxu0 %v1455
    %2239 = vmatprep.subr.mxu0 %v1454
    %2240 = vmatpush1.msra.mxu0 %v1453
    %2241 = vmatprep.subr.mxu0 %v1452
    %2242 = vmatpush1.msra.mxu0 %v1451
    %2243 = vmatprep.subr.mxu0 %v1450
    %2244 = vmatpush1.msra.mxu0 %v1449
    %2245 = vmatprep.subr.mxu0 %v1448
    %2246 = vmatpush1.msra.mxu0 %v1447
    %2247 = vmatprep.subr.mxu0 %v1446
    %2248 = vmatpush1.msra.mxu0 %v1445
    %2249 = vmatprep.subr.mxu0 0.0
    %2250 = vmatpush2.msra.mxu0 0.0
    %2251 = vmatprep.subr.mxu0 0.0
    %2252 = vmatpush2.msra.mxu0 0.0
    %2253 = vmatprep.subr.mxu0 0.0
    %2254 = vmatpush2.msra.mxu0 0.0
    %2255 = vmatprep.subr.mxu0 0.0
    %2256 = vmatpush2.msra.mxu0 0.0
    %2257 = vmatprep.subr.mxu0 0.0
    %2258 = vmatpush2.msra.mxu0 0.0
    %2259 = vmatprep.subr.mxu0 0.0
    %2260 = vmatpush2.msra.mxu0 0.0
    %2261 = vmatprep.subr.mxu0 0.0
    %2262 = vmatpush2.msra.mxu0 0.0
    %2263 = vmatprep.subr.mxu0 0.0
    %2264 = vmatpush2.msra.mxu0 0.0
    %2265 = vmatprep.subr.mxu0 0.0
    %2266 = vmatpush2.msra.mxu0 0.0
    %2267 = vmatprep.subr.mxu0 0.0
    %2268 = vmatpush2.msra.mxu0 0.0
    %2269 = vmatprep.subr.mxu0 0.0
    %2270 = vmatpush2.msra.mxu0 0.0
    %2271 = vmatprep.subr.mxu0 0.0
    %2272 = vmatpush2.msra.mxu0 0.0
    %2273 = vmatprep.subr.mxu0 0.0
    %2274 = vmatpush2.msra.mxu0 0.0
    %2275 = vmatprep.subr.mxu0 0.0
    %2276 = vmatpush2.msra.mxu0 0.0
    %2277 = vmatprep.subr.mxu0 0.0
    %2278 = vmatpush2.msra.mxu0 0.0
    %2279 = vmatprep.subr.mxu0 0.0
    %2280 = vmatpush2.msra.mxu0 0.0
    %2281 = vmatprep.mubr.f32.mxu0 0.0
    %2282 = vmatmul.mubr.f32.gmra.mxu0 %v2215
    %v2283 = vpop.f32.mrf.mxu0
    %v2284 = vadd.f32 0.0, %v2283
    %v2285 = vpop.f32.mrf.mxu0
    %v2286 = vadd.f32 0.0, %v2285
    %2287 = vdwg.mxu0
    %v2288 = vadd.f32 %v2212, %v2284
    %v2289 = vadd.f32 %v2213, %v2286
    %v2290 = vxor.u32 %v2288, 2147483648
    %v2291 = vxor.u32 %v2289, 2147483648
    %v2292 = vmul.f32 %v2290, 1.442695
    %v2293 = vpow.pop %v2292
    %v2294 = vmul.f32 %v2291, 1.442695
    %v2295 = vpow.pop %v2294
    %v2296 = vadd.f32 %v2293, 1.0
    %v2297 = vadd.f32 %v2295, 1.0
    %v2298 = vrcp.pop %v2296
    %v2299 = vmul.f32 1.0, %v2298
    %v2300 = vrcp.pop %v2297
    %v2301 = vmul.f32 1.0, %v2300
    %v2302 = vtanh.pop %v2289
    %v2303 = vmul.f32 %v2299, %v2205
    %2305 = vrot.lane.b32.xlu0 %v2302, 64
    %v2306 = vpop.permute.xlu0 %2305
    %v2308 = vmul.f32 %v2299, %v2306
    %2310 = vrot.lane.b32.xlu0 %v2308, 64
    %v2311 = vpop.permute.xlu0 %2310
    %v2313 = vadd.f32 %v2303, %v2311
    %v2314 = vtanh.pop %v2313
    %2316 = vrot.lane.b32.xlu0 %v2314, 64
    %v2317 = vpop.permute.xlu0 %2316
    %v2319 = vmul.f32 %v2301, %v2317
    %v2320 = vld [vmem:[%s7] sm:$0x1]
    %v2322 = vlaneseq
    %v2323 = vshrl.u32 %v2322, 7
    %v2324 = vsub.s32 0, %v2323
    %v2325 = vrot.slane %v2320, %v2324
    %v2327 = vmul.f32 %v2319, %v2325
    %v2328 = vsel %vm271, %v2327, 0.0
    %2329 = vadd.xlane.f32.xlu0 %v2328
    %v2330 = vpop.xlane.xlu0 %2329
    %v2331 = vld [vmem:[#allocation4] sm:$0x1]
    %v2333 = vlaneseq
    %v2334 = vshrl.u32 %v2333, 7
    %v2335 = vsub.s32 0, %v2334
    %v2336 = vrot.slane %v2331, %v2335
    %v2338 = vadd.f32 %v2330, %v2336
    %v2339 = vxor.u32 %v2338, 2147483648
    %v2340 = vmul.f32 %v2339, 1.442695
    %v2341 = vpow.pop %v2340
    %v2342 = vadd.f32 %v2341, 1.0
    %v2343 = vrcp.pop %v2342
    %v2344 = vmul.f32 1.0, %v2343
    %vm2345 = vcmask 7168
    %2346 = vst.msk [vmem:[%s9] sm:$0xff] %vm2345, %v2344
    // Predicated region
    $region50: #{tpu_custom_call.1} parent=1 // pred_check
      _
    $region51: #{tpu_custom_call.1} parent=1 // pred_check_branch
      %2348 = sbr.rel (0) target = $region53
    $region52: #{tpu_custom_call.1} parent=1 // pred_region
      _
    $region53: #{tpu_custom_call.1} parent=1 // pred_fallthru
      _
    // Predicated region
    $region54: #{tpu_custom_call.1} parent=1 // pred_check
      _
    $region55: #{tpu_custom_call.1} parent=1 // pred_check_branch
      %2350 = sbr.rel (0) target = $region57
    $region56: #{tpu_custom_call.1} parent=1 // pred_region
      _
    $region57: #{tpu_custom_call.1} parent=1 // pred_fallthru
      _
    %2351 = vsyncpa [#allocation6], 1
    %2352 = vsyncpa [#allocation8], 1

</llo_original>
